<compile_context>
chip_gen: v6e
topology: v6e:2x2x1
jax: 0.10.0
libtpu: 0.0.40
codegen_flags: <defaults>
</compile_context>

<pallas_src>
import jax
import jax.numpy as jnp
from jax.experimental import pallas as pl
from jax.experimental.pallas import tpu as pltpu

EMBEDDING_DIM = 6
HIDDEN_DIM = 6
TAGSET_SIZE = 2          # len(tag2idx)
VOCAB_SIZE = 16          # len(tran2idx) == 0 in the reference (degenerate); small vocab
SEQ_LEN = 8
LANES = 128

_E, _H, _T, _V = EMBEDDING_DIM, HIDDEN_DIM, TAGSET_SIZE, VOCAB_SIZE
_K = _E + _H                       # fused [x, h] width per gate

# Row layout of the single packed parameter slab (everything at lane offset 0).
ROW_EMB = 0                        # (V, E)     embedding table
ROW_WBLK = ROW_EMB + _V            # (4K, H)    block-diagonal fused gate weights
ROW_MASK = ROW_WBLK + 4 * _K       # (4, 4K)    block-selection mask (0/1)
ROW_WTAG = ROW_MASK + 4            # (H, T)     hidden2tag weight
ROW_B4 = ROW_WTAG + _H             # (4, H)     gate bias (rows: i, f, z, o)
ROW_LNG = ROW_B4 + 4               # (4, H)     gate LN gamma
ROW_LNB = ROW_LNG + 4              # (4, H)     gate LN beta
ROW_LNCG = ROW_LNB + 4             # (1, H)     cell LN gamma
ROW_LNCB = ROW_LNCG + 1            # (1, H)     cell LN beta
ROW_BTAG = ROW_LNCB + 1            # (1, T)     tag bias
SLAB_ROWS = ((ROW_BTAG + 1 + 7) // 8) * 8      # -> 96

OUT_ROWS = 16                      # rows 0:S scores, row S: h_T, row S+1: c_T


def _layer_norm(x, gamma, beta, eps=1e-5):
    mu = jnp.mean(x, axis=-1, keepdims=True)
    xc = x - mu
    var = jnp.mean(xc * xc, axis=-1, keepdims=True)
    return xc * jax.lax.rsqrt(var + eps) * gamma + beta


def lstm_tagger_kernel(ids_ref, slab_ref, out_ref):
    """ids_ref: SMEM (S,) int32; slab_ref: VMEM (96,128) f32; out_ref: VMEM (16,128) f32."""
    S = ids_ref.shape[0]
    E, H, T, K = _E, _H, _T, _K

    # ---- hoist all parameters out of the (fully unrolled) recurrence ----
    w_blk = slab_ref[ROW_WBLK:ROW_WBLK + 4 * K, 0:H]     # (4K, H)
    mask = slab_ref[ROW_MASK:ROW_MASK + 4, 0:4 * K]      # (4, 4K)
    w_tag = slab_ref[ROW_WTAG:ROW_WTAG + H, 0:T]         # (H, T)
    b4 = slab_ref[ROW_B4:ROW_B4 + 4, 0:H]                # (4, H)
    ln_g = slab_ref[ROW_LNG:ROW_LNG + 4, 0:H]            # (4, H)
    ln_b = slab_ref[ROW_LNB:ROW_LNB + 4, 0:H]            # (4, H)
    ln_cg = slab_ref[ROW_LNCG:ROW_LNCG + 1, 0:H]         # (1, H)
    ln_cb = slab_ref[ROW_LNCB:ROW_LNCB + 1, 0:H]         # (1, H)
    b_tag = slab_ref[ROW_BTAG:ROW_BTAG + 1, 0:T]         # (1, T)

    h = jnp.zeros((1, H), jnp.float32)    # init_hidden(): zeros
    c = jnp.zeros((1, H), jnp.float32)

    hs = []
    for t in range(S):                    # fully unrolled recurrence
        tok = ids_ref[t]                                       # scalar id from SMEM
        x = slab_ref[pl.ds(ROW_EMB + tok, 1), :][:, 0:E]       # in-kernel embedding gather
        xh = jnp.concatenate([x, h], axis=-1)                  # (1, K)
        xh4 = jnp.concatenate([xh, xh, xh, xh], axis=-1)       # (1, 4K)
        a = mask * xh4                                         # (4, 4K) block-diagonal lhs
        # ONE matmul per step producing all 4 gates as a (4, H) block.
        gates = jnp.dot(a, w_blk, preferred_element_type=jnp.float32) + b4
        # ONE fused layer-norm + ONE sigmoid over the whole (4, H) gate block.
        g = jax.nn.sigmoid(_layer_norm(gates, ln_g, ln_b))
        i_g = g[0:1, :]
        f_g = g[1:2, :]
        z_g = g[2:3, :]
        o_g = g[3:4, :]
        c = f_g * c + z_g - i_g                                # subtractive gating
        h = jax.nn.sigmoid(_layer_norm(c, ln_cg, ln_cb)) - o_g
        hs.append(h)

    hseq = jnp.concatenate(hs, axis=0)                         # (S, H), stays in vregs

    # hidden2tag + log_softmax(dim=1)
    logits = jnp.dot(hseq, w_tag, preferred_element_type=jnp.float32) + b_tag   # (S, T)
    m = jnp.max(logits, axis=1, keepdims=True)
    shifted = logits - m
    lse = jnp.log(jnp.sum(jnp.exp(shifted), axis=1, keepdims=True))
    scores = shifted - lse

    # Single lane-dense output slab: rows 0:S scores, row S final h, row S+1 final c.
    out_ref[...] = jnp.zeros_like(out_ref)
    out_ref[0:S, 0:T] = scores
    out_ref[S:S + 1, 0:H] = h
    out_ref[S + 1:S + 2, 0:H] = c


def pack_params(params):
    """One-time packing of all weights into a single lane-dense (96, 128) f32 slab."""
    E, H, T, V, K = _E, _H, _T, _V, _K
    w_cat = jnp.concatenate([params["w_ih"], params["w_hh"]], axis=0)     # (K, 4H)
    # Block-diagonal layout: rows g*K:(g+1)*K of w_blk == W_cat[:, g*H:(g+1)*H]
    w_blk = jnp.concatenate([w_cat[:, g * H:(g + 1) * H] for g in range(4)], axis=0)
    mask = jnp.zeros((4, 4 * K), jnp.float32)
    for g in range(4):
        mask = mask.at[g, g * K:(g + 1) * K].set(1.0)

    slab = jnp.zeros((SLAB_ROWS, LANES), jnp.float32)
    slab = slab.at[ROW_EMB:ROW_EMB + V, 0:E].set(params["embedding"])
    slab = slab.at[ROW_WBLK:ROW_WBLK + 4 * K, 0:H].set(w_blk)
    slab = slab.at[ROW_MASK:ROW_MASK + 4, 0:4 * K].set(mask)
    slab = slab.at[ROW_WTAG:ROW_WTAG + H, 0:T].set(params["w_tag"])
    slab = slab.at[ROW_B4:ROW_B4 + 4, 0:H].set(params["b"].reshape(4, H))
    slab = slab.at[ROW_LNG:ROW_LNG + 4, 0:H].set(params["ln_gamma"])
    slab = slab.at[ROW_LNB:ROW_LNB + 4, 0:H].set(params["ln_beta"])
    slab = slab.at[ROW_LNCG, 0:H].set(params["ln_c_gamma"][0])
    slab = slab.at[ROW_LNCB, 0:H].set(params["ln_c_beta"][0])
    slab = slab.at[ROW_BTAG, 0:T].set(params["b_tag"][0])
    return slab


@jax.jit
def lstm_tagger_forward(sentence, slab):
    """sentence: (S,) int32 token ids; slab: packed params. Returns (scores, (h, c))."""
    S = sentence.shape[0]
    out = pl.pallas_call(
        lstm_tagger_kernel,
        out_shape=jax.ShapeDtypeStruct((OUT_ROWS, LANES), jnp.float32),
        in_specs=[
            pl.BlockSpec(memory_space=pltpu.MemorySpace.SMEM),   # token ids (scalars)
            pl.BlockSpec(memory_space=pltpu.MemorySpace.VMEM),   # packed param slab
        ],
        out_specs=pl.BlockSpec(memory_space=pltpu.MemorySpace.VMEM),
    )(sentence.astype(jnp.int32), slab)
    scores = out[0:S, 0:_T]
    h = out[S:S + 1, 0:_H]
    c = out[S + 1:S + 2, 0:_H]
    return scores, (h, c)


def init_params(key, vocab, E, H, T):
    ks = jax.random.split(key, 8)
    scale_ih = 1.0 / jnp.sqrt(E)
    scale_hh = 1.0 / jnp.sqrt(H)
    return {
        "embedding": jax.random.normal(ks[0], (vocab, E), jnp.float32),
        "w_ih": jax.random.uniform(ks[1], (E, 4 * H), jnp.float32, -scale_ih, scale_ih),
        "w_hh": jax.random.uniform(ks[2], (H, 4 * H), jnp.float32, -scale_hh, scale_hh),
        "b": jax.random.uniform(ks[3], (1, 4 * H), jnp.float32, -scale_hh, scale_hh),
        "ln_gamma": jnp.ones((4, H), jnp.float32),
        "ln_beta": jnp.zeros((4, H), jnp.float32),
        "ln_c_gamma": jnp.ones((1, H), jnp.float32),
        "ln_c_beta": jnp.zeros((1, H), jnp.float32),
        "w_tag": jax.random.uniform(ks[4], (H, T), jnp.float32, -scale_hh, scale_hh),
        "b_tag": jax.random.uniform(ks[5], (1, T), jnp.float32, -scale_hh, scale_hh),
    }


def reference_forward(sentence, params):
    """Pure-JAX reference (same reconstructed subLSTM semantics)."""
    H = HIDDEN_DIM
    embeds = params["embedding"][sentence]                     # (S, E)
    h = jnp.zeros((1, H), jnp.float32)
    c = jnp.zeros((1, H), jnp.float32)
    hs = []
    for t in range(sentence.shape[0]):
        x = embeds[t:t + 1]
        gates = x @ params["w_ih"] + h @ params["w_hh"] + params["b"]   # (1, 4H)
        acts = []
        for g in range(4):
            seg = gates[:, g * H:(g + 1) * H]
            seg = _layer_norm(seg, params["ln_gamma"][g:g + 1], params["ln_beta"][g:g + 1])
            acts.append(jax.nn.sigmoid(seg))
        i_g, f_g, z_g, o_g = acts
        c = f_g * c + z_g - i_g
        h = jax.nn.sigmoid(_layer_norm(c, params["ln_c_gamma"], params["ln_c_beta"])) - o_g
        hs.append(h)
    hseq = jnp.concatenate(hs, axis=0)
    logits = hseq @ params["w_tag"] + params["b_tag"]
    return jax.nn.log_softmax(logits, axis=1), (h, c)


if __name__ == "__main__":
    key = jax.random.PRNGKey(0)
    pkey, skey = jax.random.split(key)
    params = init_params(pkey, VOCAB_SIZE, EMBEDDING_DIM, HIDDEN_DIM, TAGSET_SIZE)
    sentence = jax.random.randint(skey, (SEQ_LEN,), 0, VOCAB_SIZE, dtype=jnp.int32)

    slab = pack_params(params)                 # one-time packing, off the hot path
    tag_scores, (h, c) = lstm_tagger_forward(sentence, slab)
    jax.block_until_ready((tag_scores, h, c))

    assert tag_scores.shape == (SEQ_LEN, TAGSET_SIZE)
    # rows of log_softmax must exp-sum to 1
    assert jnp.allclose(jnp.sum(jnp.exp(tag_scores), axis=1), 1.0, atol=1e-4)

    # correctness vs. pure-JAX reference
    ref_scores, (ref_h, ref_c) = reference_forward(sentence, params)
    assert jnp.allclose(tag_scores, ref_scores, atol=1e-3, rtol=1e-3)
    assert jnp.allclose(h, ref_h, atol=1e-3, rtol=1e-3)
    assert jnp.allclose(c, ref_c, atol=1e-3, rtol=1e-3)

    print("KERNEL_OK")
</pallas_src>

<mosaic_0001>
module attributes {stable_mosaic.version = 11 : i64} {
  func.func @lstm_tagger_kernel(%arg0: memref<8xi32, #tpu.memory_space<smem>>, %arg1: memref<96x128xf32, #tpu.memory_space<vmem>>, %arg2: memref<16x128xf32, #tpu.memory_space<vmem>>) attributes {dimension_semantics = [], scalar_prefetch = 0 : i64, scratch_operands = 0 : i64, tpu.core_type = #tpu.core_type<tc>} {
    %c16 = arith.constant 16 : index
    %c0 = arith.constant 0 : index
    %0 = vector.load %arg1[%c16, %c0] : memref<96x128xf32, #tpu.memory_space<vmem>>, vector<48x6xf32>
    %c64 = arith.constant 64 : index
    %c0_0 = arith.constant 0 : index
    %1 = vector.load %arg1[%c64, %c0_0] : memref<96x128xf32, #tpu.memory_space<vmem>>, vector<4x48xf32>
    %c68 = arith.constant 68 : index
    %c0_1 = arith.constant 0 : index
    %2 = vector.load %arg1[%c68, %c0_1] : memref<96x128xf32, #tpu.memory_space<vmem>>, vector<6x2xf32>
    %c74 = arith.constant 74 : index
    %c0_2 = arith.constant 0 : index
    %3 = vector.load %arg1[%c74, %c0_2] : memref<96x128xf32, #tpu.memory_space<vmem>>, vector<4x6xf32>
    %c78 = arith.constant 78 : index
    %c0_3 = arith.constant 0 : index
    %4 = vector.load %arg1[%c78, %c0_3] : memref<96x128xf32, #tpu.memory_space<vmem>>, vector<4x6xf32>
    %c82 = arith.constant 82 : index
    %c0_4 = arith.constant 0 : index
    %5 = vector.load %arg1[%c82, %c0_4] : memref<96x128xf32, #tpu.memory_space<vmem>>, vector<4x6xf32>
    %c86 = arith.constant 86 : index
    %c0_5 = arith.constant 0 : index
    %6 = vector.load %arg1[%c86, %c0_5] : memref<96x128xf32, #tpu.memory_space<vmem>>, vector<1x6xf32>
    %c87 = arith.constant 87 : index
    %c0_6 = arith.constant 0 : index
    %7 = vector.load %arg1[%c87, %c0_6] : memref<96x128xf32, #tpu.memory_space<vmem>>, vector<1x6xf32>
    %c88 = arith.constant 88 : index
    %c0_7 = arith.constant 0 : index
    %8 = vector.load %arg1[%c88, %c0_7] : memref<96x128xf32, #tpu.memory_space<vmem>>, vector<1x2xf32>
    %cst = arith.constant 0.000000e+00 : f32
    %9 = vector.broadcast %cst : f32 to vector<1x6xf32>
    %cst_8 = arith.constant 0.000000e+00 : f32
    %10 = vector.broadcast %cst_8 : f32 to vector<1x6xf32>
    %c0_9 = arith.constant 0 : index
    %11 = memref.load %arg0[%c0_9] : memref<8xi32, #tpu.memory_space<smem>>
    %c0_i32 = arith.constant 0 : i32
    %12 = arith.addi %c0_i32, %11 : i32
    %13 = arith.index_cast %12 : i32 to index
    %c0_10 = arith.constant 0 : index
    %14 = vector.load %arg1[%13, %c0_10] : memref<96x128xf32, #tpu.memory_space<vmem>>, vector<1x128xf32>
    %15 = vector.extract_strided_slice %14 {offsets = [0, 0], sizes = [1, 6], strides = [1, 1]} : vector<1x128xf32> to vector<1x6xf32>
    %16 = tpu.concatenate %15, %9 in 1 : vector<1x6xf32>, vector<1x6xf32> -> vector<1x12xf32>
    %17 = tpu.concatenate %16, %16, %16, %16 in 1 : vector<1x12xf32>, vector<1x12xf32>, vector<1x12xf32>, vector<1x12xf32> -> vector<1x48xf32>
    %18 = vector.broadcast %17 : vector<1x48xf32> to vector<4x48xf32>
    %19 = arith.mulf %1, %18 : vector<4x48xf32>
    %cst_11 = arith.constant dense<0.000000e+00> : vector<4x6xf32>
    %20 = tpu.matmul %19, %0, %cst_11 {dimension_numbers = #tpu.dot_dimension_numbers<[1], [0], [0], [1], [0, 0, 1, 1], [], []>} : vector<4x48xf32>, vector<48x6xf32>, vector<4x6xf32> -> vector<4x6xf32>
    %21 = arith.addf %20, %3 : vector<4x6xf32>
    %cst_12 = arith.constant dense<0.000000e+00> : vector<4xf32>
    %22 = vector.multi_reduction <add>, %21, %cst_12 [1] : vector<4x6xf32> to vector<4xf32>
    %23 = vector.shape_cast %22 : vector<4xf32> to vector<4x1xf32>
    %cst_13 = arith.constant 6.000000e+00 : f32
    %24 = vector.broadcast %cst_13 : f32 to vector<4x1xf32>
    %25 = arith.divf %23, %24 : vector<4x1xf32>
    %26 = vector.broadcast %25 : vector<4x1xf32> to vector<4x6xf32>
    %27 = arith.subf %21, %26 : vector<4x6xf32>
    %28 = arith.mulf %27, %27 : vector<4x6xf32>
    %cst_14 = arith.constant dense<0.000000e+00> : vector<4xf32>
    %29 = vector.multi_reduction <add>, %28, %cst_14 [1] : vector<4x6xf32> to vector<4xf32>
    %30 = vector.shape_cast %29 : vector<4xf32> to vector<4x1xf32>
    %cst_15 = arith.constant 6.000000e+00 : f32
    %31 = vector.broadcast %cst_15 : f32 to vector<4x1xf32>
    %32 = arith.divf %30, %31 : vector<4x1xf32>
    %cst_16 = arith.constant 9.99999974E-6 : f32
    %33 = vector.broadcast %cst_16 : f32 to vector<4x1xf32>
    %34 = arith.addf %32, %33 : vector<4x1xf32>
    %35 = math.rsqrt %34 : vector<4x1xf32>
    %36 = vector.broadcast %35 : vector<4x1xf32> to vector<4x6xf32>
    %37 = arith.mulf %27, %36 : vector<4x6xf32>
    %38 = arith.mulf %37, %4 : vector<4x6xf32>
    %39 = arith.addf %38, %5 : vector<4x6xf32>
    %40 = arith.negf %39 : vector<4x6xf32>
    %41 = math.exp %40 : vector<4x6xf32>
    %cst_17 = arith.constant 1.000000e+00 : f32
    %42 = vector.broadcast %cst_17 : f32 to vector<4x6xf32>
    %43 = arith.addf %42, %41 : vector<4x6xf32>
    %44 = arith.divf %42, %43 : vector<4x6xf32>
    %45 = vector.extract_strided_slice %44 {offsets = [0, 0], sizes = [1, 6], strides = [1, 1]} : vector<4x6xf32> to vector<1x6xf32>
    %46 = vector.extract_strided_slice %44 {offsets = [1, 0], sizes = [1, 6], strides = [1, 1]} : vector<4x6xf32> to vector<1x6xf32>
    %47 = vector.extract_strided_slice %44 {offsets = [2, 0], sizes = [1, 6], strides = [1, 1]} : vector<4x6xf32> to vector<1x6xf32>
    %48 = vector.extract_strided_slice %44 {offsets = [3, 0], sizes = [1, 6], strides = [1, 1]} : vector<4x6xf32> to vector<1x6xf32>
    %49 = arith.mulf %46, %10 : vector<1x6xf32>
    %50 = arith.addf %49, %47 : vector<1x6xf32>
    %51 = arith.subf %50, %45 : vector<1x6xf32>
    %cst_18 = arith.constant dense<0.000000e+00> : vector<1xf32>
    %52 = vector.multi_reduction <add>, %51, %cst_18 [1] : vector<1x6xf32> to vector<1xf32>
    %53 = vector.shape_cast %52 : vector<1xf32> to vector<1x1xf32>
    %cst_19 = arith.constant 6.000000e+00 : f32
    %54 = vector.broadcast %cst_19 : f32 to vector<1x1xf32>
    %55 = arith.divf %53, %54 : vector<1x1xf32>
    %56 = vector.broadcast %55 : vector<1x1xf32> to vector<1x6xf32>
    %57 = arith.subf %51, %56 : vector<1x6xf32>
    %58 = arith.mulf %57, %57 : vector<1x6xf32>
    %cst_20 = arith.constant dense<0.000000e+00> : vector<1xf32>
    %59 = vector.multi_reduction <add>, %58, %cst_20 [1] : vector<1x6xf32> to vector<1xf32>
    %60 = vector.shape_cast %59 : vector<1xf32> to vector<1x1xf32>
    %cst_21 = arith.constant 6.000000e+00 : f32
    %61 = vector.broadcast %cst_21 : f32 to vector<1x1xf32>
    %62 = arith.divf %60, %61 : vector<1x1xf32>
    %cst_22 = arith.constant 9.99999974E-6 : f32
    %63 = vector.broadcast %cst_22 : f32 to vector<1x1xf32>
    %64 = arith.addf %62, %63 : vector<1x1xf32>
    %65 = math.rsqrt %64 : vector<1x1xf32>
    %66 = vector.broadcast %65 : vector<1x1xf32> to vector<1x6xf32>
    %67 = arith.mulf %57, %66 : vector<1x6xf32>
    %68 = arith.mulf %67, %6 : vector<1x6xf32>
    %69 = arith.addf %68, %7 : vector<1x6xf32>
    %70 = arith.negf %69 : vector<1x6xf32>
    %71 = math.exp %70 : vector<1x6xf32>
    %cst_23 = arith.constant 1.000000e+00 : f32
    %72 = vector.broadcast %cst_23 : f32 to vector<1x6xf32>
    %73 = arith.addf %72, %71 : vector<1x6xf32>
    %74 = arith.divf %72, %73 : vector<1x6xf32>
    %75 = arith.subf %74, %48 : vector<1x6xf32>
    %c1 = arith.constant 1 : index
    %76 = memref.load %arg0[%c1] : memref<8xi32, #tpu.memory_space<smem>>
    %c0_i32_24 = arith.constant 0 : i32
    %77 = arith.addi %c0_i32_24, %76 : i32
    %78 = arith.index_cast %77 : i32 to index
    %c0_25 = arith.constant 0 : index
    %79 = vector.load %arg1[%78, %c0_25] : memref<96x128xf32, #tpu.memory_space<vmem>>, vector<1x128xf32>
    %80 = vector.extract_strided_slice %79 {offsets = [0, 0], sizes = [1, 6], strides = [1, 1]} : vector<1x128xf32> to vector<1x6xf32>
    %81 = tpu.concatenate %80, %75 in 1 : vector<1x6xf32>, vector<1x6xf32> -> vector<1x12xf32>
    %82 = tpu.concatenate %81, %81, %81, %81 in 1 : vector<1x12xf32>, vector<1x12xf32>, vector<1x12xf32>, vector<1x12xf32> -> vector<1x48xf32>
    %83 = vector.broadcast %82 : vector<1x48xf32> to vector<4x48xf32>
    %84 = arith.mulf %1, %83 : vector<4x48xf32>
    %cst_26 = arith.constant dense<0.000000e+00> : vector<4x6xf32>
    %85 = tpu.matmul %84, %0, %cst_26 {dimension_numbers = #tpu.dot_dimension_numbers<[1], [0], [0], [1], [0, 0, 1, 1], [], []>} : vector<4x48xf32>, vector<48x6xf32>, vector<4x6xf32> -> vector<4x6xf32>
    %86 = arith.addf %85, %3 : vector<4x6xf32>
    %cst_27 = arith.constant dense<0.000000e+00> : vector<4xf32>
    %87 = vector.multi_reduction <add>, %86, %cst_27 [1] : vector<4x6xf32> to vector<4xf32>
    %88 = vector.shape_cast %87 : vector<4xf32> to vector<4x1xf32>
    %cst_28 = arith.constant 6.000000e+00 : f32
    %89 = vector.broadcast %cst_28 : f32 to vector<4x1xf32>
    %90 = arith.divf %88, %89 : vector<4x1xf32>
    %91 = vector.broadcast %90 : vector<4x1xf32> to vector<4x6xf32>
    %92 = arith.subf %86, %91 : vector<4x6xf32>
    %93 = arith.mulf %92, %92 : vector<4x6xf32>
    %cst_29 = arith.constant dense<0.000000e+00> : vector<4xf32>
    %94 = vector.multi_reduction <add>, %93, %cst_29 [1] : vector<4x6xf32> to vector<4xf32>
    %95 = vector.shape_cast %94 : vector<4xf32> to vector<4x1xf32>
    %cst_30 = arith.constant 6.000000e+00 : f32
    %96 = vector.broadcast %cst_30 : f32 to vector<4x1xf32>
    %97 = arith.divf %95, %96 : vector<4x1xf32>
    %cst_31 = arith.constant 9.99999974E-6 : f32
    %98 = vector.broadcast %cst_31 : f32 to vector<4x1xf32>
    %99 = arith.addf %97, %98 : vector<4x1xf32>
    %100 = math.rsqrt %99 : vector<4x1xf32>
    %101 = vector.broadcast %100 : vector<4x1xf32> to vector<4x6xf32>
    %102 = arith.mulf %92, %101 : vector<4x6xf32>
    %103 = arith.mulf %102, %4 : vector<4x6xf32>
    %104 = arith.addf %103, %5 : vector<4x6xf32>
    %105 = arith.negf %104 : vector<4x6xf32>
    %106 = math.exp %105 : vector<4x6xf32>
    %cst_32 = arith.constant 1.000000e+00 : f32
    %107 = vector.broadcast %cst_32 : f32 to vector<4x6xf32>
    %108 = arith.addf %107, %106 : vector<4x6xf32>
    %109 = arith.divf %107, %108 : vector<4x6xf32>
    %110 = vector.extract_strided_slice %109 {offsets = [0, 0], sizes = [1, 6], strides = [1, 1]} : vector<4x6xf32> to vector<1x6xf32>
    %111 = vector.extract_strided_slice %109 {offsets = [1, 0], sizes = [1, 6], strides = [1, 1]} : vector<4x6xf32> to vector<1x6xf32>
    %112 = vector.extract_strided_slice %109 {offsets = [2, 0], sizes = [1, 6], strides = [1, 1]} : vector<4x6xf32> to vector<1x6xf32>
    %113 = vector.extract_strided_slice %109 {offsets = [3, 0], sizes = [1, 6], strides = [1, 1]} : vector<4x6xf32> to vector<1x6xf32>
    %114 = arith.mulf %111, %51 : vector<1x6xf32>
    %115 = arith.addf %114, %112 : vector<1x6xf32>
    %116 = arith.subf %115, %110 : vector<1x6xf32>
    %cst_33 = arith.constant dense<0.000000e+00> : vector<1xf32>
    %117 = vector.multi_reduction <add>, %116, %cst_33 [1] : vector<1x6xf32> to vector<1xf32>
    %118 = vector.shape_cast %117 : vector<1xf32> to vector<1x1xf32>
    %cst_34 = arith.constant 6.000000e+00 : f32
    %119 = vector.broadcast %cst_34 : f32 to vector<1x1xf32>
    %120 = arith.divf %118, %119 : vector<1x1xf32>
    %121 = vector.broadcast %120 : vector<1x1xf32> to vector<1x6xf32>
    %122 = arith.subf %116, %121 : vector<1x6xf32>
    %123 = arith.mulf %122, %122 : vector<1x6xf32>
    %cst_35 = arith.constant dense<0.000000e+00> : vector<1xf32>
    %124 = vector.multi_reduction <add>, %123, %cst_35 [1] : vector<1x6xf32> to vector<1xf32>
    %125 = vector.shape_cast %124 : vector<1xf32> to vector<1x1xf32>
    %cst_36 = arith.constant 6.000000e+00 : f32
    %126 = vector.broadcast %cst_36 : f32 to vector<1x1xf32>
    %127 = arith.divf %125, %126 : vector<1x1xf32>
    %cst_37 = arith.constant 9.99999974E-6 : f32
    %128 = vector.broadcast %cst_37 : f32 to vector<1x1xf32>
    %129 = arith.addf %127, %128 : vector<1x1xf32>
    %130 = math.rsqrt %129 : vector<1x1xf32>
    %131 = vector.broadcast %130 : vector<1x1xf32> to vector<1x6xf32>
    %132 = arith.mulf %122, %131 : vector<1x6xf32>
    %133 = arith.mulf %132, %6 : vector<1x6xf32>
    %134 = arith.addf %133, %7 : vector<1x6xf32>
    %135 = arith.negf %134 : vector<1x6xf32>
    %136 = math.exp %135 : vector<1x6xf32>
    %cst_38 = arith.constant 1.000000e+00 : f32
    %137 = vector.broadcast %cst_38 : f32 to vector<1x6xf32>
    %138 = arith.addf %137, %136 : vector<1x6xf32>
    %139 = arith.divf %137, %138 : vector<1x6xf32>
    %140 = arith.subf %139, %113 : vector<1x6xf32>
    %c2 = arith.constant 2 : index
    %141 = memref.load %arg0[%c2] : memref<8xi32, #tpu.memory_space<smem>>
    %c0_i32_39 = arith.constant 0 : i32
    %142 = arith.addi %c0_i32_39, %141 : i32
    %143 = arith.index_cast %142 : i32 to index
    %c0_40 = arith.constant 0 : index
    %144 = vector.load %arg1[%143, %c0_40] : memref<96x128xf32, #tpu.memory_space<vmem>>, vector<1x128xf32>
    %145 = vector.extract_strided_slice %144 {offsets = [0, 0], sizes = [1, 6], strides = [1, 1]} : vector<1x128xf32> to vector<1x6xf32>
    %146 = tpu.concatenate %145, %140 in 1 : vector<1x6xf32>, vector<1x6xf32> -> vector<1x12xf32>
    %147 = tpu.concatenate %146, %146, %146, %146 in 1 : vector<1x12xf32>, vector<1x12xf32>, vector<1x12xf32>, vector<1x12xf32> -> vector<1x48xf32>
    %148 = vector.broadcast %147 : vector<1x48xf32> to vector<4x48xf32>
    %149 = arith.mulf %1, %148 : vector<4x48xf32>
    %cst_41 = arith.constant dense<0.000000e+00> : vector<4x6xf32>
    %150 = tpu.matmul %149, %0, %cst_41 {dimension_numbers = #tpu.dot_dimension_numbers<[1], [0], [0], [1], [0, 0, 1, 1], [], []>} : vector<4x48xf32>, vector<48x6xf32>, vector<4x6xf32> -> vector<4x6xf32>
    %151 = arith.addf %150, %3 : vector<4x6xf32>
    %cst_42 = arith.constant dense<0.000000e+00> : vector<4xf32>
    %152 = vector.multi_reduction <add>, %151, %cst_42 [1] : vector<4x6xf32> to vector<4xf32>
    %153 = vector.shape_cast %152 : vector<4xf32> to vector<4x1xf32>
    %cst_43 = arith.constant 6.000000e+00 : f32
    %154 = vector.broadcast %cst_43 : f32 to vector<4x1xf32>
    %155 = arith.divf %153, %154 : vector<4x1xf32>
    %156 = vector.broadcast %155 : vector<4x1xf32> to vector<4x6xf32>
    %157 = arith.subf %151, %156 : vector<4x6xf32>
    %158 = arith.mulf %157, %157 : vector<4x6xf32>
    %cst_44 = arith.constant dense<0.000000e+00> : vector<4xf32>
    %159 = vector.multi_reduction <add>, %158, %cst_44 [1] : vector<4x6xf32> to vector<4xf32>
    %160 = vector.shape_cast %159 : vector<4xf32> to vector<4x1xf32>
    %cst_45 = arith.constant 6.000000e+00 : f32
    %161 = vector.broadcast %cst_45 : f32 to vector<4x1xf32>
    %162 = arith.divf %160, %161 : vector<4x1xf32>
    %cst_46 = arith.constant 9.99999974E-6 : f32
    %163 = vector.broadcast %cst_46 : f32 to vector<4x1xf32>
    %164 = arith.addf %162, %163 : vector<4x1xf32>
    %165 = math.rsqrt %164 : vector<4x1xf32>
    %166 = vector.broadcast %165 : vector<4x1xf32> to vector<4x6xf32>
    %167 = arith.mulf %157, %166 : vector<4x6xf32>
    %168 = arith.mulf %167, %4 : vector<4x6xf32>
    %169 = arith.addf %168, %5 : vector<4x6xf32>
    %170 = arith.negf %169 : vector<4x6xf32>
    %171 = math.exp %170 : vector<4x6xf32>
    %cst_47 = arith.constant 1.000000e+00 : f32
    %172 = vector.broadcast %cst_47 : f32 to vector<4x6xf32>
    %173 = arith.addf %172, %171 : vector<4x6xf32>
    %174 = arith.divf %172, %173 : vector<4x6xf32>
    %175 = vector.extract_strided_slice %174 {offsets = [0, 0], sizes = [1, 6], strides = [1, 1]} : vector<4x6xf32> to vector<1x6xf32>
    %176 = vector.extract_strided_slice %174 {offsets = [1, 0], sizes = [1, 6], strides = [1, 1]} : vector<4x6xf32> to vector<1x6xf32>
    %177 = vector.extract_strided_slice %174 {offsets = [2, 0], sizes = [1, 6], strides = [1, 1]} : vector<4x6xf32> to vector<1x6xf32>
    %178 = vector.extract_strided_slice %174 {offsets = [3, 0], sizes = [1, 6], strides = [1, 1]} : vector<4x6xf32> to vector<1x6xf32>
    %179 = arith.mulf %176, %116 : vector<1x6xf32>
    %180 = arith.addf %179, %177 : vector<1x6xf32>
    %181 = arith.subf %180, %175 : vector<1x6xf32>
    %cst_48 = arith.constant dense<0.000000e+00> : vector<1xf32>
    %182 = vector.multi_reduction <add>, %181, %cst_48 [1] : vector<1x6xf32> to vector<1xf32>
    %183 = vector.shape_cast %182 : vector<1xf32> to vector<1x1xf32>
    %cst_49 = arith.constant 6.000000e+00 : f32
    %184 = vector.broadcast %cst_49 : f32 to vector<1x1xf32>
    %185 = arith.divf %183, %184 : vector<1x1xf32>
    %186 = vector.broadcast %185 : vector<1x1xf32> to vector<1x6xf32>
    %187 = arith.subf %181, %186 : vector<1x6xf32>
    %188 = arith.mulf %187, %187 : vector<1x6xf32>
    %cst_50 = arith.constant dense<0.000000e+00> : vector<1xf32>
    %189 = vector.multi_reduction <add>, %188, %cst_50 [1] : vector<1x6xf32> to vector<1xf32>
    %190 = vector.shape_cast %189 : vector<1xf32> to vector<1x1xf32>
    %cst_51 = arith.constant 6.000000e+00 : f32
    %191 = vector.broadcast %cst_51 : f32 to vector<1x1xf32>
    %192 = arith.divf %190, %191 : vector<1x1xf32>
    %cst_52 = arith.constant 9.99999974E-6 : f32
    %193 = vector.broadcast %cst_52 : f32 to vector<1x1xf32>
    %194 = arith.addf %192, %193 : vector<1x1xf32>
    %195 = math.rsqrt %194 : vector<1x1xf32>
    %196 = vector.broadcast %195 : vector<1x1xf32> to vector<1x6xf32>
    %197 = arith.mulf %187, %196 : vector<1x6xf32>
    %198 = arith.mulf %197, %6 : vector<1x6xf32>
    %199 = arith.addf %198, %7 : vector<1x6xf32>
    %200 = arith.negf %199 : vector<1x6xf32>
    %201 = math.exp %200 : vector<1x6xf32>
    %cst_53 = arith.constant 1.000000e+00 : f32
    %202 = vector.broadcast %cst_53 : f32 to vector<1x6xf32>
    %203 = arith.addf %202, %201 : vector<1x6xf32>
    %204 = arith.divf %202, %203 : vector<1x6xf32>
    %205 = arith.subf %204, %178 : vector<1x6xf32>
    %c3 = arith.constant 3 : index
    %206 = memref.load %arg0[%c3] : memref<8xi32, #tpu.memory_space<smem>>
    %c0_i32_54 = arith.constant 0 : i32
    %207 = arith.addi %c0_i32_54, %206 : i32
    %208 = arith.index_cast %207 : i32 to index
    %c0_55 = arith.constant 0 : index
    %209 = vector.load %arg1[%208, %c0_55] : memref<96x128xf32, #tpu.memory_space<vmem>>, vector<1x128xf32>
    %210 = vector.extract_strided_slice %209 {offsets = [0, 0], sizes = [1, 6], strides = [1, 1]} : vector<1x128xf32> to vector<1x6xf32>
    %211 = tpu.concatenate %210, %205 in 1 : vector<1x6xf32>, vector<1x6xf32> -> vector<1x12xf32>
    %212 = tpu.concatenate %211, %211, %211, %211 in 1 : vector<1x12xf32>, vector<1x12xf32>, vector<1x12xf32>, vector<1x12xf32> -> vector<1x48xf32>
    %213 = vector.broadcast %212 : vector<1x48xf32> to vector<4x48xf32>
    %214 = arith.mulf %1, %213 : vector<4x48xf32>
    %cst_56 = arith.constant dense<0.000000e+00> : vector<4x6xf32>
    %215 = tpu.matmul %214, %0, %cst_56 {dimension_numbers = #tpu.dot_dimension_numbers<[1], [0], [0], [1], [0, 0, 1, 1], [], []>} : vector<4x48xf32>, vector<48x6xf32>, vector<4x6xf32> -> vector<4x6xf32>
    %216 = arith.addf %215, %3 : vector<4x6xf32>
    %cst_57 = arith.constant dense<0.000000e+00> : vector<4xf32>
    %217 = vector.multi_reduction <add>, %216, %cst_57 [1] : vector<4x6xf32> to vector<4xf32>
    %218 = vector.shape_cast %217 : vector<4xf32> to vector<4x1xf32>
    %cst_58 = arith.constant 6.000000e+00 : f32
    %219 = vector.broadcast %cst_58 : f32 to vector<4x1xf32>
    %220 = arith.divf %218, %219 : vector<4x1xf32>
    %221 = vector.broadcast %220 : vector<4x1xf32> to vector<4x6xf32>
    %222 = arith.subf %216, %221 : vector<4x6xf32>
    %223 = arith.mulf %222, %222 : vector<4x6xf32>
    %cst_59 = arith.constant dense<0.000000e+00> : vector<4xf32>
    %224 = vector.multi_reduction <add>, %223, %cst_59 [1] : vector<4x6xf32> to vector<4xf32>
    %225 = vector.shape_cast %224 : vector<4xf32> to vector<4x1xf32>
    %cst_60 = arith.constant 6.000000e+00 : f32
    %226 = vector.broadcast %cst_60 : f32 to vector<4x1xf32>
    %227 = arith.divf %225, %226 : vector<4x1xf32>
    %cst_61 = arith.constant 9.99999974E-6 : f32
    %228 = vector.broadcast %cst_61 : f32 to vector<4x1xf32>
    %229 = arith.addf %227, %228 : vector<4x1xf32>
    %230 = math.rsqrt %229 : vector<4x1xf32>
    %231 = vector.broadcast %230 : vector<4x1xf32> to vector<4x6xf32>
    %232 = arith.mulf %222, %231 : vector<4x6xf32>
    %233 = arith.mulf %232, %4 : vector<4x6xf32>
    %234 = arith.addf %233, %5 : vector<4x6xf32>
    %235 = arith.negf %234 : vector<4x6xf32>
    %236 = math.exp %235 : vector<4x6xf32>
    %cst_62 = arith.constant 1.000000e+00 : f32
    %237 = vector.broadcast %cst_62 : f32 to vector<4x6xf32>
    %238 = arith.addf %237, %236 : vector<4x6xf32>
    %239 = arith.divf %237, %238 : vector<4x6xf32>
    %240 = vector.extract_strided_slice %239 {offsets = [0, 0], sizes = [1, 6], strides = [1, 1]} : vector<4x6xf32> to vector<1x6xf32>
    %241 = vector.extract_strided_slice %239 {offsets = [1, 0], sizes = [1, 6], strides = [1, 1]} : vector<4x6xf32> to vector<1x6xf32>
    %242 = vector.extract_strided_slice %239 {offsets = [2, 0], sizes = [1, 6], strides = [1, 1]} : vector<4x6xf32> to vector<1x6xf32>
    %243 = vector.extract_strided_slice %239 {offsets = [3, 0], sizes = [1, 6], strides = [1, 1]} : vector<4x6xf32> to vector<1x6xf32>
    %244 = arith.mulf %241, %181 : vector<1x6xf32>
    %245 = arith.addf %244, %242 : vector<1x6xf32>
    %246 = arith.subf %245, %240 : vector<1x6xf32>
    %cst_63 = arith.constant dense<0.000000e+00> : vector<1xf32>
    %247 = vector.multi_reduction <add>, %246, %cst_63 [1] : vector<1x6xf32> to vector<1xf32>
    %248 = vector.shape_cast %247 : vector<1xf32> to vector<1x1xf32>
    %cst_64 = arith.constant 6.000000e+00 : f32
    %249 = vector.broadcast %cst_64 : f32 to vector<1x1xf32>
    %250 = arith.divf %248, %249 : vector<1x1xf32>
    %251 = vector.broadcast %250 : vector<1x1xf32> to vector<1x6xf32>
    %252 = arith.subf %246, %251 : vector<1x6xf32>
    %253 = arith.mulf %252, %252 : vector<1x6xf32>
    %cst_65 = arith.constant dense<0.000000e+00> : vector<1xf32>
    %254 = vector.multi_reduction <add>, %253, %cst_65 [1] : vector<1x6xf32> to vector<1xf32>
    %255 = vector.shape_cast %254 : vector<1xf32> to vector<1x1xf32>
    %cst_66 = arith.constant 6.000000e+00 : f32
    %256 = vector.broadcast %cst_66 : f32 to vector<1x1xf32>
    %257 = arith.divf %255, %256 : vector<1x1xf32>
    %cst_67 = arith.constant 9.99999974E-6 : f32
    %258 = vector.broadcast %cst_67 : f32 to vector<1x1xf32>
    %259 = arith.addf %257, %258 : vector<1x1xf32>
    %260 = math.rsqrt %259 : vector<1x1xf32>
    %261 = vector.broadcast %260 : vector<1x1xf32> to vector<1x6xf32>
    %262 = arith.mulf %252, %261 : vector<1x6xf32>
    %263 = arith.mulf %262, %6 : vector<1x6xf32>
    %264 = arith.addf %263, %7 : vector<1x6xf32>
    %265 = arith.negf %264 : vector<1x6xf32>
    %266 = math.exp %265 : vector<1x6xf32>
    %cst_68 = arith.constant 1.000000e+00 : f32
    %267 = vector.broadcast %cst_68 : f32 to vector<1x6xf32>
    %268 = arith.addf %267, %266 : vector<1x6xf32>
    %269 = arith.divf %267, %268 : vector<1x6xf32>
    %270 = arith.subf %269, %243 : vector<1x6xf32>
    %c4 = arith.constant 4 : index
    %271 = memref.load %arg0[%c4] : memref<8xi32, #tpu.memory_space<smem>>
    %c0_i32_69 = arith.constant 0 : i32
    %272 = arith.addi %c0_i32_69, %271 : i32
    %273 = arith.index_cast %272 : i32 to index
    %c0_70 = arith.constant 0 : index
    %274 = vector.load %arg1[%273, %c0_70] : memref<96x128xf32, #tpu.memory_space<vmem>>, vector<1x128xf32>
    %275 = vector.extract_strided_slice %274 {offsets = [0, 0], sizes = [1, 6], strides = [1, 1]} : vector<1x128xf32> to vector<1x6xf32>
    %276 = tpu.concatenate %275, %270 in 1 : vector<1x6xf32>, vector<1x6xf32> -> vector<1x12xf32>
    %277 = tpu.concatenate %276, %276, %276, %276 in 1 : vector<1x12xf32>, vector<1x12xf32>, vector<1x12xf32>, vector<1x12xf32> -> vector<1x48xf32>
    %278 = vector.broadcast %277 : vector<1x48xf32> to vector<4x48xf32>
    %279 = arith.mulf %1, %278 : vector<4x48xf32>
    %cst_71 = arith.constant dense<0.000000e+00> : vector<4x6xf32>
    %280 = tpu.matmul %279, %0, %cst_71 {dimension_numbers = #tpu.dot_dimension_numbers<[1], [0], [0], [1], [0, 0, 1, 1], [], []>} : vector<4x48xf32>, vector<48x6xf32>, vector<4x6xf32> -> vector<4x6xf32>
    %281 = arith.addf %280, %3 : vector<4x6xf32>
    %cst_72 = arith.constant dense<0.000000e+00> : vector<4xf32>
    %282 = vector.multi_reduction <add>, %281, %cst_72 [1] : vector<4x6xf32> to vector<4xf32>
    %283 = vector.shape_cast %282 : vector<4xf32> to vector<4x1xf32>
    %cst_73 = arith.constant 6.000000e+00 : f32
    %284 = vector.broadcast %cst_73 : f32 to vector<4x1xf32>
    %285 = arith.divf %283, %284 : vector<4x1xf32>
    %286 = vector.broadcast %285 : vector<4x1xf32> to vector<4x6xf32>
    %287 = arith.subf %281, %286 : vector<4x6xf32>
    %288 = arith.mulf %287, %287 : vector<4x6xf32>
    %cst_74 = arith.constant dense<0.000000e+00> : vector<4xf32>
    %289 = vector.multi_reduction <add>, %288, %cst_74 [1] : vector<4x6xf32> to vector<4xf32>
    %290 = vector.shape_cast %289 : vector<4xf32> to vector<4x1xf32>
    %cst_75 = arith.constant 6.000000e+00 : f32
    %291 = vector.broadcast %cst_75 : f32 to vector<4x1xf32>
    %292 = arith.divf %290, %291 : vector<4x1xf32>
    %cst_76 = arith.constant 9.99999974E-6 : f32
    %293 = vector.broadcast %cst_76 : f32 to vector<4x1xf32>
    %294 = arith.addf %292, %293 : vector<4x1xf32>
    %295 = math.rsqrt %294 : vector<4x1xf32>
    %296 = vector.broadcast %295 : vector<4x1xf32> to vector<4x6xf32>
    %297 = arith.mulf %287, %296 : vector<4x6xf32>
    %298 = arith.mulf %297, %4 : vector<4x6xf32>
    %299 = arith.addf %298, %5 : vector<4x6xf32>
    %300 = arith.negf %299 : vector<4x6xf32>
    %301 = math.exp %300 : vector<4x6xf32>
    %cst_77 = arith.constant 1.000000e+00 : f32
    %302 = vector.broadcast %cst_77 : f32 to vector<4x6xf32>
    %303 = arith.addf %302, %301 : vector<4x6xf32>
    %304 = arith.divf %302, %303 : vector<4x6xf32>
    %305 = vector.extract_strided_slice %304 {offsets = [0, 0], sizes = [1, 6], strides = [1, 1]} : vector<4x6xf32> to vector<1x6xf32>
    %306 = vector.extract_strided_slice %304 {offsets = [1, 0], sizes = [1, 6], strides = [1, 1]} : vector<4x6xf32> to vector<1x6xf32>
    %307 = vector.extract_strided_slice %304 {offsets = [2, 0], sizes = [1, 6], strides = [1, 1]} : vector<4x6xf32> to vector<1x6xf32>
    %308 = vector.extract_strided_slice %304 {offsets = [3, 0], sizes = [1, 6], strides = [1, 1]} : vector<4x6xf32> to vector<1x6xf32>
    %309 = arith.mulf %306, %246 : vector<1x6xf32>
    %310 = arith.addf %309, %307 : vector<1x6xf32>
    %311 = arith.subf %310, %305 : vector<1x6xf32>
    %cst_78 = arith.constant dense<0.000000e+00> : vector<1xf32>
    %312 = vector.multi_reduction <add>, %311, %cst_78 [1] : vector<1x6xf32> to vector<1xf32>
    %313 = vector.shape_cast %312 : vector<1xf32> to vector<1x1xf32>
    %cst_79 = arith.constant 6.000000e+00 : f32
    %314 = vector.broadcast %cst_79 : f32 to vector<1x1xf32>
    %315 = arith.divf %313, %314 : vector<1x1xf32>
    %316 = vector.broadcast %315 : vector<1x1xf32> to vector<1x6xf32>
    %317 = arith.subf %311, %316 : vector<1x6xf32>
    %318 = arith.mulf %317, %317 : vector<1x6xf32>
    %cst_80 = arith.constant dense<0.000000e+00> : vector<1xf32>
    %319 = vector.multi_reduction <add>, %318, %cst_80 [1] : vector<1x6xf32> to vector<1xf32>
    %320 = vector.shape_cast %319 : vector<1xf32> to vector<1x1xf32>
    %cst_81 = arith.constant 6.000000e+00 : f32
    %321 = vector.broadcast %cst_81 : f32 to vector<1x1xf32>
    %322 = arith.divf %320, %321 : vector<1x1xf32>
    %cst_82 = arith.constant 9.99999974E-6 : f32
    %323 = vector.broadcast %cst_82 : f32 to vector<1x1xf32>
    %324 = arith.addf %322, %323 : vector<1x1xf32>
    %325 = math.rsqrt %324 : vector<1x1xf32>
    %326 = vector.broadcast %325 : vector<1x1xf32> to vector<1x6xf32>
    %327 = arith.mulf %317, %326 : vector<1x6xf32>
    %328 = arith.mulf %327, %6 : vector<1x6xf32>
    %329 = arith.addf %328, %7 : vector<1x6xf32>
    %330 = arith.negf %329 : vector<1x6xf32>
    %331 = math.exp %330 : vector<1x6xf32>
    %cst_83 = arith.constant 1.000000e+00 : f32
    %332 = vector.broadcast %cst_83 : f32 to vector<1x6xf32>
    %333 = arith.addf %332, %331 : vector<1x6xf32>
    %334 = arith.divf %332, %333 : vector<1x6xf32>
    %335 = arith.subf %334, %308 : vector<1x6xf32>
    %c5 = arith.constant 5 : index
    %336 = memref.load %arg0[%c5] : memref<8xi32, #tpu.memory_space<smem>>
    %c0_i32_84 = arith.constant 0 : i32
    %337 = arith.addi %c0_i32_84, %336 : i32
    %338 = arith.index_cast %337 : i32 to index
    %c0_85 = arith.constant 0 : index
    %339 = vector.load %arg1[%338, %c0_85] : memref<96x128xf32, #tpu.memory_space<vmem>>, vector<1x128xf32>
    %340 = vector.extract_strided_slice %339 {offsets = [0, 0], sizes = [1, 6], strides = [1, 1]} : vector<1x128xf32> to vector<1x6xf32>
    %341 = tpu.concatenate %340, %335 in 1 : vector<1x6xf32>, vector<1x6xf32> -> vector<1x12xf32>
    %342 = tpu.concatenate %341, %341, %341, %341 in 1 : vector<1x12xf32>, vector<1x12xf32>, vector<1x12xf32>, vector<1x12xf32> -> vector<1x48xf32>
    %343 = vector.broadcast %342 : vector<1x48xf32> to vector<4x48xf32>
    %344 = arith.mulf %1, %343 : vector<4x48xf32>
    %cst_86 = arith.constant dense<0.000000e+00> : vector<4x6xf32>
    %345 = tpu.matmul %344, %0, %cst_86 {dimension_numbers = #tpu.dot_dimension_numbers<[1], [0], [0], [1], [0, 0, 1, 1], [], []>} : vector<4x48xf32>, vector<48x6xf32>, vector<4x6xf32> -> vector<4x6xf32>
    %346 = arith.addf %345, %3 : vector<4x6xf32>
    %cst_87 = arith.constant dense<0.000000e+00> : vector<4xf32>
    %347 = vector.multi_reduction <add>, %346, %cst_87 [1] : vector<4x6xf32> to vector<4xf32>
    %348 = vector.shape_cast %347 : vector<4xf32> to vector<4x1xf32>
    %cst_88 = arith.constant 6.000000e+00 : f32
    %349 = vector.broadcast %cst_88 : f32 to vector<4x1xf32>
    %350 = arith.divf %348, %349 : vector<4x1xf32>
    %351 = vector.broadcast %350 : vector<4x1xf32> to vector<4x6xf32>
    %352 = arith.subf %346, %351 : vector<4x6xf32>
    %353 = arith.mulf %352, %352 : vector<4x6xf32>
    %cst_89 = arith.constant dense<0.000000e+00> : vector<4xf32>
    %354 = vector.multi_reduction <add>, %353, %cst_89 [1] : vector<4x6xf32> to vector<4xf32>
    %355 = vector.shape_cast %354 : vector<4xf32> to vector<4x1xf32>
    %cst_90 = arith.constant 6.000000e+00 : f32
    %356 = vector.broadcast %cst_90 : f32 to vector<4x1xf32>
    %357 = arith.divf %355, %356 : vector<4x1xf32>
    %cst_91 = arith.constant 9.99999974E-6 : f32
    %358 = vector.broadcast %cst_91 : f32 to vector<4x1xf32>
    %359 = arith.addf %357, %358 : vector<4x1xf32>
    %360 = math.rsqrt %359 : vector<4x1xf32>
    %361 = vector.broadcast %360 : vector<4x1xf32> to vector<4x6xf32>
    %362 = arith.mulf %352, %361 : vector<4x6xf32>
    %363 = arith.mulf %362, %4 : vector<4x6xf32>
    %364 = arith.addf %363, %5 : vector<4x6xf32>
    %365 = arith.negf %364 : vector<4x6xf32>
    %366 = math.exp %365 : vector<4x6xf32>
    %cst_92 = arith.constant 1.000000e+00 : f32
    %367 = vector.broadcast %cst_92 : f32 to vector<4x6xf32>
    %368 = arith.addf %367, %366 : vector<4x6xf32>
    %369 = arith.divf %367, %368 : vector<4x6xf32>
    %370 = vector.extract_strided_slice %369 {offsets = [0, 0], sizes = [1, 6], strides = [1, 1]} : vector<4x6xf32> to vector<1x6xf32>
    %371 = vector.extract_strided_slice %369 {offsets = [1, 0], sizes = [1, 6], strides = [1, 1]} : vector<4x6xf32> to vector<1x6xf32>
    %372 = vector.extract_strided_slice %369 {offsets = [2, 0], sizes = [1, 6], strides = [1, 1]} : vector<4x6xf32> to vector<1x6xf32>
    %373 = vector.extract_strided_slice %369 {offsets = [3, 0], sizes = [1, 6], strides = [1, 1]} : vector<4x6xf32> to vector<1x6xf32>
    %374 = arith.mulf %371, %311 : vector<1x6xf32>
    %375 = arith.addf %374, %372 : vector<1x6xf32>
    %376 = arith.subf %375, %370 : vector<1x6xf32>
    %cst_93 = arith.constant dense<0.000000e+00> : vector<1xf32>
    %377 = vector.multi_reduction <add>, %376, %cst_93 [1] : vector<1x6xf32> to vector<1xf32>
    %378 = vector.shape_cast %377 : vector<1xf32> to vector<1x1xf32>
    %cst_94 = arith.constant 6.000000e+00 : f32
    %379 = vector.broadcast %cst_94 : f32 to vector<1x1xf32>
    %380 = arith.divf %378, %379 : vector<1x1xf32>
    %381 = vector.broadcast %380 : vector<1x1xf32> to vector<1x6xf32>
    %382 = arith.subf %376, %381 : vector<1x6xf32>
    %383 = arith.mulf %382, %382 : vector<1x6xf32>
    %cst_95 = arith.constant dense<0.000000e+00> : vector<1xf32>
    %384 = vector.multi_reduction <add>, %383, %cst_95 [1] : vector<1x6xf32> to vector<1xf32>
    %385 = vector.shape_cast %384 : vector<1xf32> to vector<1x1xf32>
    %cst_96 = arith.constant 6.000000e+00 : f32
    %386 = vector.broadcast %cst_96 : f32 to vector<1x1xf32>
    %387 = arith.divf %385, %386 : vector<1x1xf32>
    %cst_97 = arith.constant 9.99999974E-6 : f32
    %388 = vector.broadcast %cst_97 : f32 to vector<1x1xf32>
    %389 = arith.addf %387, %388 : vector<1x1xf32>
    %390 = math.rsqrt %389 : vector<1x1xf32>
    %391 = vector.broadcast %390 : vector<1x1xf32> to vector<1x6xf32>
    %392 = arith.mulf %382, %391 : vector<1x6xf32>
    %393 = arith.mulf %392, %6 : vector<1x6xf32>
    %394 = arith.addf %393, %7 : vector<1x6xf32>
    %395 = arith.negf %394 : vector<1x6xf32>
    %396 = math.exp %395 : vector<1x6xf32>
    %cst_98 = arith.constant 1.000000e+00 : f32
    %397 = vector.broadcast %cst_98 : f32 to vector<1x6xf32>
    %398 = arith.addf %397, %396 : vector<1x6xf32>
    %399 = arith.divf %397, %398 : vector<1x6xf32>
    %400 = arith.subf %399, %373 : vector<1x6xf32>
    %c6 = arith.constant 6 : index
    %401 = memref.load %arg0[%c6] : memref<8xi32, #tpu.memory_space<smem>>
    %c0_i32_99 = arith.constant 0 : i32
    %402 = arith.addi %c0_i32_99, %401 : i32
    %403 = arith.index_cast %402 : i32 to index
    %c0_100 = arith.constant 0 : index
    %404 = vector.load %arg1[%403, %c0_100] : memref<96x128xf32, #tpu.memory_space<vmem>>, vector<1x128xf32>
    %405 = vector.extract_strided_slice %404 {offsets = [0, 0], sizes = [1, 6], strides = [1, 1]} : vector<1x128xf32> to vector<1x6xf32>
    %406 = tpu.concatenate %405, %400 in 1 : vector<1x6xf32>, vector<1x6xf32> -> vector<1x12xf32>
    %407 = tpu.concatenate %406, %406, %406, %406 in 1 : vector<1x12xf32>, vector<1x12xf32>, vector<1x12xf32>, vector<1x12xf32> -> vector<1x48xf32>
    %408 = vector.broadcast %407 : vector<1x48xf32> to vector<4x48xf32>
    %409 = arith.mulf %1, %408 : vector<4x48xf32>
    %cst_101 = arith.constant dense<0.000000e+00> : vector<4x6xf32>
    %410 = tpu.matmul %409, %0, %cst_101 {dimension_numbers = #tpu.dot_dimension_numbers<[1], [0], [0], [1], [0, 0, 1, 1], [], []>} : vector<4x48xf32>, vector<48x6xf32>, vector<4x6xf32> -> vector<4x6xf32>
    %411 = arith.addf %410, %3 : vector<4x6xf32>
    %cst_102 = arith.constant dense<0.000000e+00> : vector<4xf32>
    %412 = vector.multi_reduction <add>, %411, %cst_102 [1] : vector<4x6xf32> to vector<4xf32>
    %413 = vector.shape_cast %412 : vector<4xf32> to vector<4x1xf32>
    %cst_103 = arith.constant 6.000000e+00 : f32
    %414 = vector.broadcast %cst_103 : f32 to vector<4x1xf32>
    %415 = arith.divf %413, %414 : vector<4x1xf32>
    %416 = vector.broadcast %415 : vector<4x1xf32> to vector<4x6xf32>
    %417 = arith.subf %411, %416 : vector<4x6xf32>
    %418 = arith.mulf %417, %417 : vector<4x6xf32>
    %cst_104 = arith.constant dense<0.000000e+00> : vector<4xf32>
    %419 = vector.multi_reduction <add>, %418, %cst_104 [1] : vector<4x6xf32> to vector<4xf32>
    %420 = vector.shape_cast %419 : vector<4xf32> to vector<4x1xf32>
    %cst_105 = arith.constant 6.000000e+00 : f32
    %421 = vector.broadcast %cst_105 : f32 to vector<4x1xf32>
    %422 = arith.divf %420, %421 : vector<4x1xf32>
    %cst_106 = arith.constant 9.99999974E-6 : f32
    %423 = vector.broadcast %cst_106 : f32 to vector<4x1xf32>
    %424 = arith.addf %422, %423 : vector<4x1xf32>
    %425 = math.rsqrt %424 : vector<4x1xf32>
    %426 = vector.broadcast %425 : vector<4x1xf32> to vector<4x6xf32>
    %427 = arith.mulf %417, %426 : vector<4x6xf32>
    %428 = arith.mulf %427, %4 : vector<4x6xf32>
    %429 = arith.addf %428, %5 : vector<4x6xf32>
    %430 = arith.negf %429 : vector<4x6xf32>
    %431 = math.exp %430 : vector<4x6xf32>
    %cst_107 = arith.constant 1.000000e+00 : f32
    %432 = vector.broadcast %cst_107 : f32 to vector<4x6xf32>
    %433 = arith.addf %432, %431 : vector<4x6xf32>
    %434 = arith.divf %432, %433 : vector<4x6xf32>
    %435 = vector.extract_strided_slice %434 {offsets = [0, 0], sizes = [1, 6], strides = [1, 1]} : vector<4x6xf32> to vector<1x6xf32>
    %436 = vector.extract_strided_slice %434 {offsets = [1, 0], sizes = [1, 6], strides = [1, 1]} : vector<4x6xf32> to vector<1x6xf32>
    %437 = vector.extract_strided_slice %434 {offsets = [2, 0], sizes = [1, 6], strides = [1, 1]} : vector<4x6xf32> to vector<1x6xf32>
    %438 = vector.extract_strided_slice %434 {offsets = [3, 0], sizes = [1, 6], strides = [1, 1]} : vector<4x6xf32> to vector<1x6xf32>
    %439 = arith.mulf %436, %376 : vector<1x6xf32>
    %440 = arith.addf %439, %437 : vector<1x6xf32>
    %441 = arith.subf %440, %435 : vector<1x6xf32>
    %cst_108 = arith.constant dense<0.000000e+00> : vector<1xf32>
    %442 = vector.multi_reduction <add>, %441, %cst_108 [1] : vector<1x6xf32> to vector<1xf32>
    %443 = vector.shape_cast %442 : vector<1xf32> to vector<1x1xf32>
    %cst_109 = arith.constant 6.000000e+00 : f32
    %444 = vector.broadcast %cst_109 : f32 to vector<1x1xf32>
    %445 = arith.divf %443, %444 : vector<1x1xf32>
    %446 = vector.broadcast %445 : vector<1x1xf32> to vector<1x6xf32>
    %447 = arith.subf %441, %446 : vector<1x6xf32>
    %448 = arith.mulf %447, %447 : vector<1x6xf32>
    %cst_110 = arith.constant dense<0.000000e+00> : vector<1xf32>
    %449 = vector.multi_reduction <add>, %448, %cst_110 [1] : vector<1x6xf32> to vector<1xf32>
    %450 = vector.shape_cast %449 : vector<1xf32> to vector<1x1xf32>
    %cst_111 = arith.constant 6.000000e+00 : f32
    %451 = vector.broadcast %cst_111 : f32 to vector<1x1xf32>
    %452 = arith.divf %450, %451 : vector<1x1xf32>
    %cst_112 = arith.constant 9.99999974E-6 : f32
    %453 = vector.broadcast %cst_112 : f32 to vector<1x1xf32>
    %454 = arith.addf %452, %453 : vector<1x1xf32>
    %455 = math.rsqrt %454 : vector<1x1xf32>
    %456 = vector.broadcast %455 : vector<1x1xf32> to vector<1x6xf32>
    %457 = arith.mulf %447, %456 : vector<1x6xf32>
    %458 = arith.mulf %457, %6 : vector<1x6xf32>
    %459 = arith.addf %458, %7 : vector<1x6xf32>
    %460 = arith.negf %459 : vector<1x6xf32>
    %461 = math.exp %460 : vector<1x6xf32>
    %cst_113 = arith.constant 1.000000e+00 : f32
    %462 = vector.broadcast %cst_113 : f32 to vector<1x6xf32>
    %463 = arith.addf %462, %461 : vector<1x6xf32>
    %464 = arith.divf %462, %463 : vector<1x6xf32>
    %465 = arith.subf %464, %438 : vector<1x6xf32>
    %c7 = arith.constant 7 : index
    %466 = memref.load %arg0[%c7] : memref<8xi32, #tpu.memory_space<smem>>
    %c0_i32_114 = arith.constant 0 : i32
    %467 = arith.addi %c0_i32_114, %466 : i32
    %468 = arith.index_cast %467 : i32 to index
    %c0_115 = arith.constant 0 : index
    %469 = vector.load %arg1[%468, %c0_115] : memref<96x128xf32, #tpu.memory_space<vmem>>, vector<1x128xf32>
    %470 = vector.extract_strided_slice %469 {offsets = [0, 0], sizes = [1, 6], strides = [1, 1]} : vector<1x128xf32> to vector<1x6xf32>
    %471 = tpu.concatenate %470, %465 in 1 : vector<1x6xf32>, vector<1x6xf32> -> vector<1x12xf32>
    %472 = tpu.concatenate %471, %471, %471, %471 in 1 : vector<1x12xf32>, vector<1x12xf32>, vector<1x12xf32>, vector<1x12xf32> -> vector<1x48xf32>
    %473 = vector.broadcast %472 : vector<1x48xf32> to vector<4x48xf32>
    %474 = arith.mulf %1, %473 : vector<4x48xf32>
    %cst_116 = arith.constant dense<0.000000e+00> : vector<4x6xf32>
    %475 = tpu.matmul %474, %0, %cst_116 {dimension_numbers = #tpu.dot_dimension_numbers<[1], [0], [0], [1], [0, 0, 1, 1], [], []>} : vector<4x48xf32>, vector<48x6xf32>, vector<4x6xf32> -> vector<4x6xf32>
    %476 = arith.addf %475, %3 : vector<4x6xf32>
    %cst_117 = arith.constant dense<0.000000e+00> : vector<4xf32>
    %477 = vector.multi_reduction <add>, %476, %cst_117 [1] : vector<4x6xf32> to vector<4xf32>
    %478 = vector.shape_cast %477 : vector<4xf32> to vector<4x1xf32>
    %cst_118 = arith.constant 6.000000e+00 : f32
    %479 = vector.broadcast %cst_118 : f32 to vector<4x1xf32>
    %480 = arith.divf %478, %479 : vector<4x1xf32>
    %481 = vector.broadcast %480 : vector<4x1xf32> to vector<4x6xf32>
    %482 = arith.subf %476, %481 : vector<4x6xf32>
    %483 = arith.mulf %482, %482 : vector<4x6xf32>
    %cst_119 = arith.constant dense<0.000000e+00> : vector<4xf32>
    %484 = vector.multi_reduction <add>, %483, %cst_119 [1] : vector<4x6xf32> to vector<4xf32>
    %485 = vector.shape_cast %484 : vector<4xf32> to vector<4x1xf32>
    %cst_120 = arith.constant 6.000000e+00 : f32
    %486 = vector.broadcast %cst_120 : f32 to vector<4x1xf32>
    %487 = arith.divf %485, %486 : vector<4x1xf32>
    %cst_121 = arith.constant 9.99999974E-6 : f32
    %488 = vector.broadcast %cst_121 : f32 to vector<4x1xf32>
    %489 = arith.addf %487, %488 : vector<4x1xf32>
    %490 = math.rsqrt %489 : vector<4x1xf32>
    %491 = vector.broadcast %490 : vector<4x1xf32> to vector<4x6xf32>
    %492 = arith.mulf %482, %491 : vector<4x6xf32>
    %493 = arith.mulf %492, %4 : vector<4x6xf32>
    %494 = arith.addf %493, %5 : vector<4x6xf32>
    %495 = arith.negf %494 : vector<4x6xf32>
    %496 = math.exp %495 : vector<4x6xf32>
    %cst_122 = arith.constant 1.000000e+00 : f32
    %497 = vector.broadcast %cst_122 : f32 to vector<4x6xf32>
    %498 = arith.addf %497, %496 : vector<4x6xf32>
    %499 = arith.divf %497, %498 : vector<4x6xf32>
    %500 = vector.extract_strided_slice %499 {offsets = [0, 0], sizes = [1, 6], strides = [1, 1]} : vector<4x6xf32> to vector<1x6xf32>
    %501 = vector.extract_strided_slice %499 {offsets = [1, 0], sizes = [1, 6], strides = [1, 1]} : vector<4x6xf32> to vector<1x6xf32>
    %502 = vector.extract_strided_slice %499 {offsets = [2, 0], sizes = [1, 6], strides = [1, 1]} : vector<4x6xf32> to vector<1x6xf32>
    %503 = vector.extract_strided_slice %499 {offsets = [3, 0], sizes = [1, 6], strides = [1, 1]} : vector<4x6xf32> to vector<1x6xf32>
    %504 = arith.mulf %501, %441 : vector<1x6xf32>
    %505 = arith.addf %504, %502 : vector<1x6xf32>
    %506 = arith.subf %505, %500 : vector<1x6xf32>
    %cst_123 = arith.constant dense<0.000000e+00> : vector<1xf32>
    %507 = vector.multi_reduction <add>, %506, %cst_123 [1] : vector<1x6xf32> to vector<1xf32>
    %508 = vector.shape_cast %507 : vector<1xf32> to vector<1x1xf32>
    %cst_124 = arith.constant 6.000000e+00 : f32
    %509 = vector.broadcast %cst_124 : f32 to vector<1x1xf32>
    %510 = arith.divf %508, %509 : vector<1x1xf32>
    %511 = vector.broadcast %510 : vector<1x1xf32> to vector<1x6xf32>
    %512 = arith.subf %506, %511 : vector<1x6xf32>
    %513 = arith.mulf %512, %512 : vector<1x6xf32>
    %cst_125 = arith.constant dense<0.000000e+00> : vector<1xf32>
    %514 = vector.multi_reduction <add>, %513, %cst_125 [1] : vector<1x6xf32> to vector<1xf32>
    %515 = vector.shape_cast %514 : vector<1xf32> to vector<1x1xf32>
    %cst_126 = arith.constant 6.000000e+00 : f32
    %516 = vector.broadcast %cst_126 : f32 to vector<1x1xf32>
    %517 = arith.divf %515, %516 : vector<1x1xf32>
    %cst_127 = arith.constant 9.99999974E-6 : f32
    %518 = vector.broadcast %cst_127 : f32 to vector<1x1xf32>
    %519 = arith.addf %517, %518 : vector<1x1xf32>
    %520 = math.rsqrt %519 : vector<1x1xf32>
    %521 = vector.broadcast %520 : vector<1x1xf32> to vector<1x6xf32>
    %522 = arith.mulf %512, %521 : vector<1x6xf32>
    %523 = arith.mulf %522, %6 : vector<1x6xf32>
    %524 = arith.addf %523, %7 : vector<1x6xf32>
    %525 = arith.negf %524 : vector<1x6xf32>
    %526 = math.exp %525 : vector<1x6xf32>
    %cst_128 = arith.constant 1.000000e+00 : f32
    %527 = vector.broadcast %cst_128 : f32 to vector<1x6xf32>
    %528 = arith.addf %527, %526 : vector<1x6xf32>
    %529 = arith.divf %527, %528 : vector<1x6xf32>
    %530 = arith.subf %529, %503 : vector<1x6xf32>
    %531 = tpu.concatenate %75, %140, %205, %270, %335, %400, %465, %530 in 0 : vector<1x6xf32>, vector<1x6xf32>, vector<1x6xf32>, vector<1x6xf32>, vector<1x6xf32>, vector<1x6xf32>, vector<1x6xf32>, vector<1x6xf32> -> vector<8x6xf32>
    %cst_129 = arith.constant dense<0.000000e+00> : vector<8x2xf32>
    %532 = tpu.matmul %531, %2, %cst_129 {dimension_numbers = #tpu.dot_dimension_numbers<[1], [0], [0], [1], [0, 0, 1, 1], [], []>} : vector<8x6xf32>, vector<6x2xf32>, vector<8x2xf32> -> vector<8x2xf32>
    %533 = vector.broadcast %8 : vector<1x2xf32> to vector<8x2xf32>
    %534 = arith.addf %532, %533 : vector<8x2xf32>
    %cst_130 = arith.constant dense<0xFF800000> : vector<8xf32>
    %535 = vector.multi_reduction <maximumf>, %534, %cst_130 [1] : vector<8x2xf32> to vector<8xf32>
    %536 = vector.shape_cast %535 : vector<8xf32> to vector<8x1xf32>
    %537 = vector.broadcast %536 : vector<8x1xf32> to vector<8x2xf32>
    %538 = arith.subf %534, %537 : vector<8x2xf32>
    %539 = math.exp %538 : vector<8x2xf32>
    %cst_131 = arith.constant dense<0.000000e+00> : vector<8xf32>
    %540 = vector.multi_reduction <add>, %539, %cst_131 [1] : vector<8x2xf32> to vector<8xf32>
    %541 = vector.shape_cast %540 : vector<8xf32> to vector<8x1xf32>
    %542 = math.log %541 : vector<8x1xf32>
    %543 = vector.broadcast %542 : vector<8x1xf32> to vector<8x2xf32>
    %544 = arith.subf %538, %543 : vector<8x2xf32>
    %cst_132 = arith.constant 0.000000e+00 : f32
    %545 = vector.broadcast %cst_132 : f32 to vector<16x128xf32>
    %c0_133 = arith.constant 0 : index
    %c0_134 = arith.constant 0 : index
    %546 = vector.load %arg2[%c0_133, %c0_134] : memref<16x128xf32, #tpu.memory_space<vmem>>, vector<16x128xf32>
    tpu.vector_store %arg2[%c0_133, %c0_134], %545 {strides = array<i32>} : memref<16x128xf32, #tpu.memory_space<vmem>>, vector<16x128xf32>,
    %c0_135 = arith.constant 0 : index
    %c0_136 = arith.constant 0 : index
    %547 = vector.load %arg2[%c0_135, %c0_136] : memref<16x128xf32, #tpu.memory_space<vmem>>, vector<8x2xf32>
    tpu.vector_store %arg2[%c0_135, %c0_136], %544 {strides = array<i32>} : memref<16x128xf32, #tpu.memory_space<vmem>>, vector<8x2xf32>,
    %c8 = arith.constant 8 : index
    %c0_137 = arith.constant 0 : index
    %548 = vector.load %arg2[%c8, %c0_137] : memref<16x128xf32, #tpu.memory_space<vmem>>, vector<1x6xf32>
    tpu.vector_store %arg2[%c8, %c0_137], %530 {strides = array<i32>} : memref<16x128xf32, #tpu.memory_space<vmem>>, vector<1x6xf32>,
    %c9 = arith.constant 9 : index
    %c0_138 = arith.constant 0 : index
    %549 = vector.load %arg2[%c9, %c0_138] : memref<16x128xf32, #tpu.memory_space<vmem>>, vector<1x6xf32>
    tpu.vector_store %arg2[%c9, %c0_138], %506 {strides = array<i32>} : memref<16x128xf32, #tpu.memory_space<vmem>>, vector<1x6xf32>,
    return
  }
}

</mosaic_0001>

<llo_original>
// kernel: lstm_tagger_forward.1
$region0: #{lstm_tagger_forward.1}
  #allocation0 [shape = 'u32[]', space=smem, size = 0x4, offset = 0x4, fixed_abs, tag = 'smem constant byte address 0x4 - core index']
  #allocation1 [shape = 'u32[144,128]{1,0:T(1,128)}', space=vmem, size = 0x12000, scoped, tag = 'internal scratch']
  %s0 = inlined_call_operand.vmem [shape: s32[8], index: 0, kind: input, shape index: {}]
  %s1 = inlined_call_operand.hbm [shape: f32[96,128], index: 1, kind: input, shape index: {}]
  %s2 = inlined_call_operand.vmem [shape: f32[16,128], index: 2, kind: output, shape index: {}]
  %s3 = sld [smem:[#allocation0]]
  $region26: #{lstm_tagger_forward.1} parent=0
    _
  %s5 = ssub.s32 1, %s3
  %s6 = scalar_select 0, %s5, %s3
  $region1: #{lstm_tagger_forward.1} parent=0
    #allocation2 [shape = 'u8[512]{0}', space=smem, size = 0x200, scoped, tag = 'input window, operand 0, single buffered']
    #allocation3 [shape = 's32[1]{0}', space=sflag, size = 0x4, scoped, tag = 'scoped memory for lstm_tagger_forward.1']
    #allocation4 [shape = 's32[1]{0}', space=sflag, size = 0x4, scoped, tag = 'scoped memory for lstm_tagger_forward.1']
    #allocation5 [shape = 'u8[49152]{0}', space=vmem, size = 0xc000, scoped, tag = 'input window, operand 1, single buffered']
    %7 = vsyncpa [#allocation4], 0
    %8 = vsyncpa [#allocation3], 0
    // Predicated region
    $region2: #{lstm_tagger_forward.1} parent=1 // pred_check
      _
    $region3: #{lstm_tagger_forward.1} parent=1 // pred_check_branch
      %10 = sbr.rel (0) target = $region5
    $region4: #{lstm_tagger_forward.1} parent=1 // pred_region
      %s12 = ssub.s32 16, 16
      %13 = vsyncadd [#allocation4], %s12
      %s15 = sshll.u32 %s0, 4
      %s16 = int_to_ptr.vmem [resolvable:$true] %s15
      %18 = dma.vmem_to_smem %s16, 16, [#allocation2], [#allocation4]
    $region5: #{lstm_tagger_forward.1} parent=1 // pred_fallthru
      _
    // Predicated region
    $region6: #{lstm_tagger_forward.1} parent=1 // pred_check
      _
    $region7: #{lstm_tagger_forward.1} parent=1 // pred_check_branch
      %20 = sbr.rel (0) target = $region9
    $region8: #{lstm_tagger_forward.1} parent=1 // pred_region
      %s22 = ssub.s32 1536, 1536
      %23 = vsyncadd [#allocation3], %s22
      %s24 = sshll.u32 [#allocation5], 4
      %s25 = int_to_ptr.vmem [resolvable:$true] %s24
      %30 = dma.hbm_to_vmem [thread:$0]  %s1, 1536, %s25, [#allocation3], 128, 128, 8
    $region9: #{lstm_tagger_forward.1} parent=1 // pred_fallthru
      _
    // Predicated region
    $region10: #{lstm_tagger_forward.1} parent=1 // pred_check
      _
    $region11: #{lstm_tagger_forward.1} parent=1 // pred_check_branch
      %32 = sbr.rel (0) target = $region13
    $region12: #{lstm_tagger_forward.1} parent=1 // pred_region
      %33 = dma.done [#allocation4], 16
    $region13: #{lstm_tagger_forward.1} parent=1 // pred_fallthru
      _
    // Predicated region
    $region14: #{lstm_tagger_forward.1} parent=1 // pred_check
      _
    $region15: #{lstm_tagger_forward.1} parent=1 // pred_check_branch
      %35 = sbr.rel (0) target = $region17
    $region16: #{lstm_tagger_forward.1} parent=1 // pred_region
      %36 = dma.done [#allocation3], 1536
    $region17: #{lstm_tagger_forward.1} parent=1 // pred_fallthru
      _
    %37 = sfence
    %v38 = vld [vmem:[#allocation5 + $0x10] sm:$0xff]
    %v39 = vld [vmem:[#allocation5 + $0x18] sm:$0xff]
    %v40 = vld [vmem:[#allocation5 + $0x20] sm:$0xff]
    %v41 = vld [vmem:[#allocation5 + $0x28] sm:$0xff]
    %v42 = vld [vmem:[#allocation5 + $0x30] sm:$0xff]
    %v43 = vld [vmem:[#allocation5 + $0x38] sm:$0xff]
    %v44 = vld [vmem:[#allocation5 + $0x40] sm:$0xf]
    %v45 = vld [vmem:[#allocation5 + $0x44] sm:$0x3f]
    %v46 = vld [vmem:[#allocation5 + $0x4a] sm:$0xf]
    %v47 = vld [vmem:[#allocation5 + $0x4e] sm:$0xf]
    %v48 = vld [vmem:[#allocation5 + $0x52] sm:$0xf]
    %v49 = vld [vmem:[#allocation5 + $0x56] sm:$0x1]
    %v50 = vld [vmem:[#allocation5 + $0x57] sm:$0x1]
    %v51 = vld [vmem:[#allocation5 + $0x58] sm:$0x1]
    %s52 = sld [smem:[#allocation2]]
    %s53 = scalar_lea.vmem [#allocation5], %s52
    %v54 = vld [vmem:[%s53] sm:$0x1]
    %vm55 = vcmask 48128
    %v56 = vsel %vm55, %v54, 0.0
    %58 = vrot.lane.b32.xlu0 %v56, 12
    %v59 = vpop.permute.xlu0 %58
    %61 = vrot.lane.b32.xlu0 %v56, 24
    %v62 = vpop.permute.xlu0 %61
    %64 = vrot.lane.b32.xlu0 %v56, 36
    %v65 = vpop.permute.xlu0 %64
    %vm67 = vcmask 97280
    %v68 = vsel %vm67, %v56, %v59
    %vm69 = vcmask 195584
    %v70 = vsel %vm69, %v68, %v62
    %vm71 = vcmask 293888
    %v72 = vsel %vm71, %v70, %v65
    %v73 = vlaneseq
    %v74 = vshrl.u32 %v73, 7
    %v75 = vsub.s32 0, %v74
    %v76 = vrot.slane %v72, %v75
    %v77 = vmul.f32 %v44, %v76
    %vm78 = vcmask 392192
    %v80 = vsel %vm78, %v77, 0
    %82 = vmatprep.subr.mxu0 0.0
    %83 = vmatpush1.msra.mxu0 0.0
    %84 = vmatprep.subr.mxu0 0.0
    %85 = vmatpush1.msra.mxu0 0.0
    %86 = vmatprep.subr.mxu0 0.0
    %87 = vmatpush1.msra.mxu0 0.0
    %88 = vmatprep.subr.mxu0 0.0
    %89 = vmatpush1.msra.mxu0 0.0
    %90 = vmatprep.subr.mxu0 0.0
    %91 = vmatpush1.msra.mxu0 0.0
    %92 = vmatprep.subr.mxu0 0.0
    %93 = vmatpush1.msra.mxu0 0.0
    %94 = vmatprep.subr.mxu0 0.0
    %95 = vmatpush1.msra.mxu0 0.0
    %96 = vmatprep.subr.mxu0 0.0
    %97 = vmatpush1.msra.mxu0 0.0
    %98 = vmatprep.subr.mxu0 0.0
    %99 = vmatpush1.msra.mxu0 0.0
    %100 = vmatprep.subr.mxu0 0.0
    %101 = vmatpush1.msra.mxu0 0.0
    %102 = vmatprep.subr.mxu0 0.0
    %103 = vmatpush1.msra.mxu0 %v43
    %104 = vmatprep.subr.mxu0 0.0
    %105 = vmatpush1.msra.mxu0 %v42
    %106 = vmatprep.subr.mxu0 0.0
    %107 = vmatpush1.msra.mxu0 %v41
    %108 = vmatprep.subr.mxu0 0.0
    %109 = vmatpush1.msra.mxu0 %v40
    %110 = vmatprep.subr.mxu0 0.0
    %111 = vmatpush1.msra.mxu0 %v39
    %112 = vmatprep.subr.mxu0 0.0
    %113 = vmatpush1.msra.mxu0 %v38
    %114 = vmatprep.subr.mxu0 0.0
    %115 = vmatpush2.msra.mxu0 0.0
    %116 = vmatprep.subr.mxu0 0.0
    %117 = vmatpush2.msra.mxu0 0.0
    %118 = vmatprep.subr.mxu0 0.0
    %119 = vmatpush2.msra.mxu0 0.0
    %120 = vmatprep.subr.mxu0 0.0
    %121 = vmatpush2.msra.mxu0 0.0
    %122 = vmatprep.subr.mxu0 0.0
    %123 = vmatpush2.msra.mxu0 0.0
    %124 = vmatprep.subr.mxu0 0.0
    %125 = vmatpush2.msra.mxu0 0.0
    %126 = vmatprep.subr.mxu0 0.0
    %127 = vmatpush2.msra.mxu0 0.0
    %128 = vmatprep.subr.mxu0 0.0
    %129 = vmatpush2.msra.mxu0 0.0
    %130 = vmatprep.subr.mxu0 0.0
    %131 = vmatpush2.msra.mxu0 0.0
    %132 = vmatprep.subr.mxu0 0.0
    %133 = vmatpush2.msra.mxu0 0.0
    %134 = vmatprep.subr.mxu0 0.0
    %135 = vmatpush2.msra.mxu0 0.0
    %136 = vmatprep.subr.mxu0 0.0
    %137 = vmatpush2.msra.mxu0 0.0
    %138 = vmatprep.subr.mxu0 0.0
    %139 = vmatpush2.msra.mxu0 0.0
    %140 = vmatprep.subr.mxu0 0.0
    %141 = vmatpush2.msra.mxu0 0.0
    %142 = vmatprep.subr.mxu0 0.0
    %143 = vmatpush2.msra.mxu0 0.0
    %144 = vmatprep.subr.mxu0 0.0
    %145 = vmatpush2.msra.mxu0 0.0
    %146 = vmatprep.mubr.f32.mxu0 0.0
    %147 = vmatmul.mubr.f32.gmra.mxu0 %v80
    %v148 = vpop.f32.mrf.mxu0
    %v149 = vadd.f32 %v46, %v148
    %v150 = vpop.f32.mrf.mxu0
    %151 = vdwg.mxu0
    %vm152 = vcmask 44032
    %v153 = vsel %vm152, %v149, 0.0
    %154 = vadd.xlane.f32.xlu0 %v153
    %v155 = vpop.xlane.xlu0 %154
    %v156 = vrcp.pop 6.0
    %v157 = vmul.f32 %v155, %v156
    %v158 = vsub.f32 %v149, %v157
    %v159 = vmul.f32 %v158, %v158
    %v160 = vsel %vm152, %v159, 0.0
    %161 = vadd.xlane.f32.xlu0 %v160
    %v162 = vpop.xlane.xlu0 %161
    %v163 = vmul.f32 %v162, %v156
    %v164 = vadd.f32 %v163, 1e-05
    %v165 = vrsqrt.pop %v164
    %v166 = vmul.f32 %v158, %v165
    %v167 = vmul.f32 %v166, %v47
    %v168 = vadd.f32 %v167, %v48
    %v169 = vxor.u32 %v168, 2147483648
    %v170 = vmul.f32 %v169, 1.442695
    %v171 = vpow.pop %v170
    %v172 = vadd.f32 %v171, 1.0
    %v173 = vrcp.pop %v172
    %v174 = vmul.f32 1.0, %v173
    %v175 = vmul.f32 %v174, 0.0
    %v177 = vrot.slane %v174, 1
    %v179 = vadd.f32 %v175, %v177
    %v180 = vrot.slane %v174, 7
    %v182 = vsub.f32 %v179, %v180
    %vm183 = vcmask 41985
    %v184 = vsel %vm183, %v182, 0.0
    %185 = vadd.xlane.f32.xlu0 %v184
    %v186 = vpop.xlane.xlu0 %185
    %v187 = vmul.f32 %v186, %v156
    %v188 = vsub.f32 %v182, %v187
    %v189 = vmul.f32 %v188, %v188
    %v190 = vsel %vm183, %v189, 0.0
    %191 = vadd.xlane.f32.xlu0 %v190
    %v192 = vpop.xlane.xlu0 %191
    %v193 = vmul.f32 %v192, %v156
    %v194 = vadd.f32 %v193, 1e-05
    %v195 = vrsqrt.pop %v194
    %v196 = vmul.f32 %v188, %v195
    %v198 = vrot.slane %v49, 7
    %v200 = vmul.f32 %v196, %v198
    %v202 = vrot.slane %v50, 7
    %v204 = vadd.f32 %v200, %v202
    %v205 = vxor.u32 %v204, 2147483648
    %v206 = vmul.f32 %v205, 1.442695
    %v207 = vpow.pop %v206
    %v208 = vadd.f32 %v207, 1.0
    %v209 = vrcp.pop %v208
    %v210 = vmul.f32 1.0, %v209
    %v211 = vrot.slane %v174, 2
    %v213 = vsub.f32 %v210, %v211
    %s214 = sld [smem:[#allocation2 + $0x1]]
    %s215 = scalar_lea.vmem [#allocation5], %s214
    %v216 = vld [vmem:[%s215] sm:$0x1]
    %v218 = vrot.slane %v213, 1
    %219 = vrot.lane.b32.xlu0 %v218, 6
    %v220 = vpop.permute.xlu0 %219
    %v222 = vsel %vm55, %v216, %v220
    %224 = vrot.lane.b32.xlu0 %v222, 12
    %v225 = vpop.permute.xlu0 %224
    %227 = vrot.lane.b32.xlu0 %v222, 24
    %v228 = vpop.permute.xlu0 %227
    %230 = vrot.lane.b32.xlu0 %v222, 36
    %v231 = vpop.permute.xlu0 %230
    %v233 = vsel %vm67, %v222, %v225
    %v234 = vsel %vm69, %v233, %v228
    %v235 = vsel %vm71, %v234, %v231
    %v236 = vlaneseq
    %v237 = vshrl.u32 %v236, 7
    %v238 = vsub.s32 0, %v237
    %v239 = vrot.slane %v235, %v238
    %v240 = vmul.f32 %v44, %v239
    %v242 = vsel %vm78, %v240, 0
    %244 = vmatprep.subr.mxu0 0.0
    %245 = vmatpush1.msra.mxu0 0.0
    %246 = vmatprep.subr.mxu0 0.0
    %247 = vmatpush1.msra.mxu0 0.0
    %248 = vmatprep.subr.mxu0 0.0
    %249 = vmatpush1.msra.mxu0 0.0
    %250 = vmatprep.subr.mxu0 0.0
    %251 = vmatpush1.msra.mxu0 0.0
    %252 = vmatprep.subr.mxu0 0.0
    %253 = vmatpush1.msra.mxu0 0.0
    %254 = vmatprep.subr.mxu0 0.0
    %255 = vmatpush1.msra.mxu0 0.0
    %256 = vmatprep.subr.mxu0 0.0
    %257 = vmatpush1.msra.mxu0 0.0
    %258 = vmatprep.subr.mxu0 0.0
    %259 = vmatpush1.msra.mxu0 0.0
    %260 = vmatprep.subr.mxu0 0.0
    %261 = vmatpush1.msra.mxu0 0.0
    %262 = vmatprep.subr.mxu0 0.0
    %263 = vmatpush1.msra.mxu0 0.0
    %264 = vmatprep.subr.mxu0 0.0
    %265 = vmatpush1.msra.mxu0 %v43
    %266 = vmatprep.subr.mxu0 0.0
    %267 = vmatpush1.msra.mxu0 %v42
    %268 = vmatprep.subr.mxu0 0.0
    %269 = vmatpush1.msra.mxu0 %v41
    %270 = vmatprep.subr.mxu0 0.0
    %271 = vmatpush1.msra.mxu0 %v40
    %272 = vmatprep.subr.mxu0 0.0
    %273 = vmatpush1.msra.mxu0 %v39
    %274 = vmatprep.subr.mxu0 0.0
    %275 = vmatpush1.msra.mxu0 %v38
    %276 = vmatprep.subr.mxu0 0.0
    %277 = vmatpush2.msra.mxu0 0.0
    %278 = vmatprep.subr.mxu0 0.0
    %279 = vmatpush2.msra.mxu0 0.0
    %280 = vmatprep.subr.mxu0 0.0
    %281 = vmatpush2.msra.mxu0 0.0
    %282 = vmatprep.subr.mxu0 0.0
    %283 = vmatpush2.msra.mxu0 0.0
    %284 = vmatprep.subr.mxu0 0.0
    %285 = vmatpush2.msra.mxu0 0.0
    %286 = vmatprep.subr.mxu0 0.0
    %287 = vmatpush2.msra.mxu0 0.0
    %288 = vmatprep.subr.mxu0 0.0
    %289 = vmatpush2.msra.mxu0 0.0
    %290 = vmatprep.subr.mxu0 0.0
    %291 = vmatpush2.msra.mxu0 0.0
    %292 = vmatprep.subr.mxu0 0.0
    %293 = vmatpush2.msra.mxu0 0.0
    %294 = vmatprep.subr.mxu0 0.0
    %295 = vmatpush2.msra.mxu0 0.0
    %296 = vmatprep.subr.mxu0 0.0
    %297 = vmatpush2.msra.mxu0 0.0
    %298 = vmatprep.subr.mxu0 0.0
    %299 = vmatpush2.msra.mxu0 0.0
    %300 = vmatprep.subr.mxu0 0.0
    %301 = vmatpush2.msra.mxu0 0.0
    %302 = vmatprep.subr.mxu0 0.0
    %303 = vmatpush2.msra.mxu0 0.0
    %304 = vmatprep.subr.mxu0 0.0
    %305 = vmatpush2.msra.mxu0 0.0
    %306 = vmatprep.subr.mxu0 0.0
    %307 = vmatpush2.msra.mxu0 0.0
    %308 = vmatprep.mubr.f32.mxu0 0.0
    %309 = vmatmul.mubr.f32.gmra.mxu0 %v242
    %v310 = vpop.f32.mrf.mxu0
    %v311 = vadd.f32 %v46, %v310
    %v312 = vpop.f32.mrf.mxu0
    %313 = vdwg.mxu0
    %v314 = vsel %vm152, %v311, 0.0
    %315 = vadd.xlane.f32.xlu0 %v314
    %v316 = vpop.xlane.xlu0 %315
    %v317 = vmul.f32 %v316, %v156
    %v318 = vsub.f32 %v311, %v317
    %v319 = vmul.f32 %v318, %v318
    %v320 = vsel %vm152, %v319, 0.0
    %321 = vadd.xlane.f32.xlu0 %v320
    %v322 = vpop.xlane.xlu0 %321
    %v323 = vmul.f32 %v322, %v156
    %v324 = vadd.f32 %v323, 1e-05
    %v325 = vrsqrt.pop %v324
    %v326 = vmul.f32 %v318, %v325
    %v327 = vmul.f32 %v326, %v47
    %v328 = vadd.f32 %v327, %v48
    %v329 = vxor.u32 %v328, 2147483648
    %v330 = vmul.f32 %v329, 1.442695
    %v331 = vpow.pop %v330
    %v332 = vadd.f32 %v331, 1.0
    %v333 = vrcp.pop %v332
    %v334 = vmul.f32 1.0, %v333
    %v335 = vmul.f32 %v334, %v182
    %v337 = vrot.slane %v334, 1
    %v339 = vadd.f32 %v335, %v337
    %v340 = vrot.slane %v334, 7
    %v342 = vsub.f32 %v339, %v340
    %v343 = vsel %vm183, %v342, 0.0
    %344 = vadd.xlane.f32.xlu0 %v343
    %v345 = vpop.xlane.xlu0 %344
    %v346 = vmul.f32 %v345, %v156
    %v347 = vsub.f32 %v342, %v346
    %v348 = vmul.f32 %v347, %v347
    %v349 = vsel %vm183, %v348, 0.0
    %350 = vadd.xlane.f32.xlu0 %v349
    %v351 = vpop.xlane.xlu0 %350
    %v352 = vmul.f32 %v351, %v156
    %v353 = vadd.f32 %v352, 1e-05
    %v354 = vrsqrt.pop %v353
    %v355 = vmul.f32 %v347, %v354
    %v356 = vmul.f32 %v355, %v198
    %v357 = vadd.f32 %v356, %v202
    %v358 = vxor.u32 %v357, 2147483648
    %v359 = vmul.f32 %v358, 1.442695
    %v360 = vpow.pop %v359
    %v361 = vadd.f32 %v360, 1.0
    %v362 = vrcp.pop %v361
    %v363 = vmul.f32 1.0, %v362
    %v364 = vrot.slane %v334, 2
    %v366 = vsub.f32 %v363, %v364
    %s367 = sld [smem:[#allocation2 + $0x2]]
    %s368 = scalar_lea.vmem [#allocation5], %s367
    %v369 = vld [vmem:[%s368] sm:$0x1]
    %v371 = vrot.slane %v366, 1
    %372 = vrot.lane.b32.xlu0 %v371, 6
    %v373 = vpop.permute.xlu0 %372
    %v375 = vsel %vm55, %v369, %v373
    %377 = vrot.lane.b32.xlu0 %v375, 12
    %v378 = vpop.permute.xlu0 %377
    %380 = vrot.lane.b32.xlu0 %v375, 24
    %v381 = vpop.permute.xlu0 %380
    %383 = vrot.lane.b32.xlu0 %v375, 36
    %v384 = vpop.permute.xlu0 %383
    %v386 = vsel %vm67, %v375, %v378
    %v387 = vsel %vm69, %v386, %v381
    %v388 = vsel %vm71, %v387, %v384
    %v389 = vlaneseq
    %v390 = vshrl.u32 %v389, 7
    %v391 = vsub.s32 0, %v390
    %v392 = vrot.slane %v388, %v391
    %v393 = vmul.f32 %v44, %v392
    %v395 = vsel %vm78, %v393, 0
    %397 = vmatprep.subr.mxu0 0.0
    %398 = vmatpush1.msra.mxu0 0.0
    %399 = vmatprep.subr.mxu0 0.0
    %400 = vmatpush1.msra.mxu0 0.0
    %401 = vmatprep.subr.mxu0 0.0
    %402 = vmatpush1.msra.mxu0 0.0
    %403 = vmatprep.subr.mxu0 0.0
    %404 = vmatpush1.msra.mxu0 0.0
    %405 = vmatprep.subr.mxu0 0.0
    %406 = vmatpush1.msra.mxu0 0.0
    %407 = vmatprep.subr.mxu0 0.0
    %408 = vmatpush1.msra.mxu0 0.0
    %409 = vmatprep.subr.mxu0 0.0
    %410 = vmatpush1.msra.mxu0 0.0
    %411 = vmatprep.subr.mxu0 0.0
    %412 = vmatpush1.msra.mxu0 0.0
    %413 = vmatprep.subr.mxu0 0.0
    %414 = vmatpush1.msra.mxu0 0.0
    %415 = vmatprep.subr.mxu0 0.0
    %416 = vmatpush1.msra.mxu0 0.0
    %417 = vmatprep.subr.mxu0 0.0
    %418 = vmatpush1.msra.mxu0 %v43
    %419 = vmatprep.subr.mxu0 0.0
    %420 = vmatpush1.msra.mxu0 %v42
    %421 = vmatprep.subr.mxu0 0.0
    %422 = vmatpush1.msra.mxu0 %v41
    %423 = vmatprep.subr.mxu0 0.0
    %424 = vmatpush1.msra.mxu0 %v40
    %425 = vmatprep.subr.mxu0 0.0
    %426 = vmatpush1.msra.mxu0 %v39
    %427 = vmatprep.subr.mxu0 0.0
    %428 = vmatpush1.msra.mxu0 %v38
    %429 = vmatprep.subr.mxu0 0.0
    %430 = vmatpush2.msra.mxu0 0.0
    %431 = vmatprep.subr.mxu0 0.0
    %432 = vmatpush2.msra.mxu0 0.0
    %433 = vmatprep.subr.mxu0 0.0
    %434 = vmatpush2.msra.mxu0 0.0
    %435 = vmatprep.subr.mxu0 0.0
    %436 = vmatpush2.msra.mxu0 0.0
    %437 = vmatprep.subr.mxu0 0.0
    %438 = vmatpush2.msra.mxu0 0.0
    %439 = vmatprep.subr.mxu0 0.0
    %440 = vmatpush2.msra.mxu0 0.0
    %441 = vmatprep.subr.mxu0 0.0
    %442 = vmatpush2.msra.mxu0 0.0
    %443 = vmatprep.subr.mxu0 0.0
    %444 = vmatpush2.msra.mxu0 0.0
    %445 = vmatprep.subr.mxu0 0.0
    %446 = vmatpush2.msra.mxu0 0.0
    %447 = vmatprep.subr.mxu0 0.0
    %448 = vmatpush2.msra.mxu0 0.0
    %449 = vmatprep.subr.mxu0 0.0
    %450 = vmatpush2.msra.mxu0 0.0
    %451 = vmatprep.subr.mxu0 0.0
    %452 = vmatpush2.msra.mxu0 0.0
    %453 = vmatprep.subr.mxu0 0.0
    %454 = vmatpush2.msra.mxu0 0.0
    %455 = vmatprep.subr.mxu0 0.0
    %456 = vmatpush2.msra.mxu0 0.0
    %457 = vmatprep.subr.mxu0 0.0
    %458 = vmatpush2.msra.mxu0 0.0
    %459 = vmatprep.subr.mxu0 0.0
    %460 = vmatpush2.msra.mxu0 0.0
    %461 = vmatprep.mubr.f32.mxu0 0.0
    %462 = vmatmul.mubr.f32.gmra.mxu0 %v395
    %v463 = vpop.f32.mrf.mxu0
    %v464 = vadd.f32 %v46, %v463
    %v465 = vpop.f32.mrf.mxu0
    %466 = vdwg.mxu0
    %v467 = vsel %vm152, %v464, 0.0
    %468 = vadd.xlane.f32.xlu0 %v467
    %v469 = vpop.xlane.xlu0 %468
    %v470 = vmul.f32 %v469, %v156
    %v471 = vsub.f32 %v464, %v470
    %v472 = vmul.f32 %v471, %v471
    %v473 = vsel %vm152, %v472, 0.0
    %474 = vadd.xlane.f32.xlu0 %v473
    %v475 = vpop.xlane.xlu0 %474
    %v476 = vmul.f32 %v475, %v156
    %v477 = vadd.f32 %v476, 1e-05
    %v478 = vrsqrt.pop %v477
    %v479 = vmul.f32 %v471, %v478
    %v480 = vmul.f32 %v479, %v47
    %v481 = vadd.f32 %v480, %v48
    %v482 = vxor.u32 %v481, 2147483648
    %v483 = vmul.f32 %v482, 1.442695
    %v484 = vpow.pop %v483
    %v485 = vadd.f32 %v484, 1.0
    %v486 = vrcp.pop %v485
    %v487 = vmul.f32 1.0, %v486
    %v488 = vmul.f32 %v487, %v342
    %v490 = vrot.slane %v487, 1
    %v492 = vadd.f32 %v488, %v490
    %v493 = vrot.slane %v487, 7
    %v495 = vsub.f32 %v492, %v493
    %v496 = vsel %vm183, %v495, 0.0
    %497 = vadd.xlane.f32.xlu0 %v496
    %v498 = vpop.xlane.xlu0 %497
    %v499 = vmul.f32 %v498, %v156
    %v500 = vsub.f32 %v495, %v499
    %v501 = vmul.f32 %v500, %v500
    %v502 = vsel %vm183, %v501, 0.0
    %503 = vadd.xlane.f32.xlu0 %v502
    %v504 = vpop.xlane.xlu0 %503
    %v505 = vmul.f32 %v504, %v156
    %v506 = vadd.f32 %v505, 1e-05
    %v507 = vrsqrt.pop %v506
    %v508 = vmul.f32 %v500, %v507
    %v509 = vmul.f32 %v508, %v198
    %v510 = vadd.f32 %v509, %v202
    %v511 = vxor.u32 %v510, 2147483648
    %v512 = vmul.f32 %v511, 1.442695
    %v513 = vpow.pop %v512
    %v514 = vadd.f32 %v513, 1.0
    %v515 = vrcp.pop %v514
    %v516 = vmul.f32 1.0, %v515
    %v517 = vrot.slane %v487, 2
    %v519 = vsub.f32 %v516, %v517
    %s520 = sld [smem:[#allocation2 + $0x3]]
    %s521 = scalar_lea.vmem [#allocation5], %s520
    %v522 = vld [vmem:[%s521] sm:$0x1]
    %v524 = vrot.slane %v519, 1
    %525 = vrot.lane.b32.xlu0 %v524, 6
    %v526 = vpop.permute.xlu0 %525
    %v528 = vsel %vm55, %v522, %v526
    %530 = vrot.lane.b32.xlu0 %v528, 12
    %v531 = vpop.permute.xlu0 %530
    %533 = vrot.lane.b32.xlu0 %v528, 24
    %v534 = vpop.permute.xlu0 %533
    %536 = vrot.lane.b32.xlu0 %v528, 36
    %v537 = vpop.permute.xlu0 %536
    %v539 = vsel %vm67, %v528, %v531
    %v540 = vsel %vm69, %v539, %v534
    %v541 = vsel %vm71, %v540, %v537
    %v542 = vlaneseq
    %v543 = vshrl.u32 %v542, 7
    %v544 = vsub.s32 0, %v543
    %v545 = vrot.slane %v541, %v544
    %v546 = vmul.f32 %v44, %v545
    %v548 = vsel %vm78, %v546, 0
    %550 = vmatprep.subr.mxu0 0.0
    %551 = vmatpush1.msra.mxu0 0.0
    %552 = vmatprep.subr.mxu0 0.0
    %553 = vmatpush1.msra.mxu0 0.0
    %554 = vmatprep.subr.mxu0 0.0
    %555 = vmatpush1.msra.mxu0 0.0
    %556 = vmatprep.subr.mxu0 0.0
    %557 = vmatpush1.msra.mxu0 0.0
    %558 = vmatprep.subr.mxu0 0.0
    %559 = vmatpush1.msra.mxu0 0.0
    %560 = vmatprep.subr.mxu0 0.0
    %561 = vmatpush1.msra.mxu0 0.0
    %562 = vmatprep.subr.mxu0 0.0
    %563 = vmatpush1.msra.mxu0 0.0
    %564 = vmatprep.subr.mxu0 0.0
    %565 = vmatpush1.msra.mxu0 0.0
    %566 = vmatprep.subr.mxu0 0.0
    %567 = vmatpush1.msra.mxu0 0.0
    %568 = vmatprep.subr.mxu0 0.0
    %569 = vmatpush1.msra.mxu0 0.0
    %570 = vmatprep.subr.mxu0 0.0
    %571 = vmatpush1.msra.mxu0 %v43
    %572 = vmatprep.subr.mxu0 0.0
    %573 = vmatpush1.msra.mxu0 %v42
    %574 = vmatprep.subr.mxu0 0.0
    %575 = vmatpush1.msra.mxu0 %v41
    %576 = vmatprep.subr.mxu0 0.0
    %577 = vmatpush1.msra.mxu0 %v40
    %578 = vmatprep.subr.mxu0 0.0
    %579 = vmatpush1.msra.mxu0 %v39
    %580 = vmatprep.subr.mxu0 0.0
    %581 = vmatpush1.msra.mxu0 %v38
    %582 = vmatprep.subr.mxu0 0.0
    %583 = vmatpush2.msra.mxu0 0.0
    %584 = vmatprep.subr.mxu0 0.0
    %585 = vmatpush2.msra.mxu0 0.0
    %586 = vmatprep.subr.mxu0 0.0
    %587 = vmatpush2.msra.mxu0 0.0
    %588 = vmatprep.subr.mxu0 0.0
    %589 = vmatpush2.msra.mxu0 0.0
    %590 = vmatprep.subr.mxu0 0.0
    %591 = vmatpush2.msra.mxu0 0.0
    %592 = vmatprep.subr.mxu0 0.0
    %593 = vmatpush2.msra.mxu0 0.0
    %594 = vmatprep.subr.mxu0 0.0
    %595 = vmatpush2.msra.mxu0 0.0
    %596 = vmatprep.subr.mxu0 0.0
    %597 = vmatpush2.msra.mxu0 0.0
    %598 = vmatprep.subr.mxu0 0.0
    %599 = vmatpush2.msra.mxu0 0.0
    %600 = vmatprep.subr.mxu0 0.0
    %601 = vmatpush2.msra.mxu0 0.0
    %602 = vmatprep.subr.mxu0 0.0
    %603 = vmatpush2.msra.mxu0 0.0
    %604 = vmatprep.subr.mxu0 0.0
    %605 = vmatpush2.msra.mxu0 0.0
    %606 = vmatprep.subr.mxu0 0.0
    %607 = vmatpush2.msra.mxu0 0.0
    %608 = vmatprep.subr.mxu0 0.0
    %609 = vmatpush2.msra.mxu0 0.0
    %610 = vmatprep.subr.mxu0 0.0
    %611 = vmatpush2.msra.mxu0 0.0
    %612 = vmatprep.subr.mxu0 0.0
    %613 = vmatpush2.msra.mxu0 0.0
    %614 = vmatprep.mubr.f32.mxu0 0.0
    %615 = vmatmul.mubr.f32.gmra.mxu0 %v548
    %v616 = vpop.f32.mrf.mxu0
    %v617 = vadd.f32 %v46, %v616
    %v618 = vpop.f32.mrf.mxu0
    %619 = vdwg.mxu0
    %v620 = vsel %vm152, %v617, 0.0
    %621 = vadd.xlane.f32.xlu0 %v620
    %v622 = vpop.xlane.xlu0 %621
    %v623 = vmul.f32 %v622, %v156
    %v624 = vsub.f32 %v617, %v623
    %v625 = vmul.f32 %v624, %v624
    %v626 = vsel %vm152, %v625, 0.0
    %627 = vadd.xlane.f32.xlu0 %v626
    %v628 = vpop.xlane.xlu0 %627
    %v629 = vmul.f32 %v628, %v156
    %v630 = vadd.f32 %v629, 1e-05
    %v631 = vrsqrt.pop %v630
    %v632 = vmul.f32 %v624, %v631
    %v633 = vmul.f32 %v632, %v47
    %v634 = vadd.f32 %v633, %v48
    %v635 = vxor.u32 %v634, 2147483648
    %v636 = vmul.f32 %v635, 1.442695
    %v637 = vpow.pop %v636
    %v638 = vadd.f32 %v637, 1.0
    %v639 = vrcp.pop %v638
    %v640 = vmul.f32 1.0, %v639
    %v641 = vmul.f32 %v640, %v495
    %v643 = vrot.slane %v640, 1
    %v645 = vadd.f32 %v641, %v643
    %v646 = vrot.slane %v640, 7
    %v648 = vsub.f32 %v645, %v646
    %v649 = vsel %vm183, %v648, 0.0
    %650 = vadd.xlane.f32.xlu0 %v649
    %v651 = vpop.xlane.xlu0 %650
    %v652 = vmul.f32 %v651, %v156
    %v653 = vsub.f32 %v648, %v652
    %v654 = vmul.f32 %v653, %v653
    %v655 = vsel %vm183, %v654, 0.0
    %656 = vadd.xlane.f32.xlu0 %v655
    %v657 = vpop.xlane.xlu0 %656
    %v658 = vmul.f32 %v657, %v156
    %v659 = vadd.f32 %v658, 1e-05
    %v660 = vrsqrt.pop %v659
    %v661 = vmul.f32 %v653, %v660
    %v662 = vmul.f32 %v661, %v198
    %v663 = vadd.f32 %v662, %v202
    %v664 = vxor.u32 %v663, 2147483648
    %v665 = vmul.f32 %v664, 1.442695
    %v666 = vpow.pop %v665
    %v667 = vadd.f32 %v666, 1.0
    %v668 = vrcp.pop %v667
    %v669 = vmul.f32 1.0, %v668
    %v670 = vrot.slane %v640, 2
    %v672 = vsub.f32 %v669, %v670
    %s673 = sld [smem:[#allocation2 + $0x4]]
    %s674 = scalar_lea.vmem [#allocation5], %s673
    %v675 = vld [vmem:[%s674] sm:$0x1]
    %v677 = vrot.slane %v672, 1
    %678 = vrot.lane.b32.xlu0 %v677, 6
    %v679 = vpop.permute.xlu0 %678
    %v681 = vsel %vm55, %v675, %v679
    %683 = vrot.lane.b32.xlu0 %v681, 12
    %v684 = vpop.permute.xlu0 %683
    %686 = vrot.lane.b32.xlu0 %v681, 24
    %v687 = vpop.permute.xlu0 %686
    %689 = vrot.lane.b32.xlu0 %v681, 36
    %v690 = vpop.permute.xlu0 %689
    %v692 = vsel %vm67, %v681, %v684
    %v693 = vsel %vm69, %v692, %v687
    %v694 = vsel %vm71, %v693, %v690
    %v695 = vlaneseq
    %v696 = vshrl.u32 %v695, 7
    %v697 = vsub.s32 0, %v696
    %v698 = vrot.slane %v694, %v697
    %v699 = vmul.f32 %v44, %v698
    %v701 = vsel %vm78, %v699, 0
    %703 = vmatprep.subr.mxu0 0.0
    %704 = vmatpush1.msra.mxu0 0.0
    %705 = vmatprep.subr.mxu0 0.0
    %706 = vmatpush1.msra.mxu0 0.0
    %707 = vmatprep.subr.mxu0 0.0
    %708 = vmatpush1.msra.mxu0 0.0
    %709 = vmatprep.subr.mxu0 0.0
    %710 = vmatpush1.msra.mxu0 0.0
    %711 = vmatprep.subr.mxu0 0.0
    %712 = vmatpush1.msra.mxu0 0.0
    %713 = vmatprep.subr.mxu0 0.0
    %714 = vmatpush1.msra.mxu0 0.0
    %715 = vmatprep.subr.mxu0 0.0
    %716 = vmatpush1.msra.mxu0 0.0
    %717 = vmatprep.subr.mxu0 0.0
    %718 = vmatpush1.msra.mxu0 0.0
    %719 = vmatprep.subr.mxu0 0.0
    %720 = vmatpush1.msra.mxu0 0.0
    %721 = vmatprep.subr.mxu0 0.0
    %722 = vmatpush1.msra.mxu0 0.0
    %723 = vmatprep.subr.mxu0 0.0
    %724 = vmatpush1.msra.mxu0 %v43
    %725 = vmatprep.subr.mxu0 0.0
    %726 = vmatpush1.msra.mxu0 %v42
    %727 = vmatprep.subr.mxu0 0.0
    %728 = vmatpush1.msra.mxu0 %v41
    %729 = vmatprep.subr.mxu0 0.0
    %730 = vmatpush1.msra.mxu0 %v40
    %731 = vmatprep.subr.mxu0 0.0
    %732 = vmatpush1.msra.mxu0 %v39
    %733 = vmatprep.subr.mxu0 0.0
    %734 = vmatpush1.msra.mxu0 %v38
    %735 = vmatprep.subr.mxu0 0.0
    %736 = vmatpush2.msra.mxu0 0.0
    %737 = vmatprep.subr.mxu0 0.0
    %738 = vmatpush2.msra.mxu0 0.0
    %739 = vmatprep.subr.mxu0 0.0
    %740 = vmatpush2.msra.mxu0 0.0
    %741 = vmatprep.subr.mxu0 0.0
    %742 = vmatpush2.msra.mxu0 0.0
    %743 = vmatprep.subr.mxu0 0.0
    %744 = vmatpush2.msra.mxu0 0.0
    %745 = vmatprep.subr.mxu0 0.0
    %746 = vmatpush2.msra.mxu0 0.0
    %747 = vmatprep.subr.mxu0 0.0
    %748 = vmatpush2.msra.mxu0 0.0
    %749 = vmatprep.subr.mxu0 0.0
    %750 = vmatpush2.msra.mxu0 0.0
    %751 = vmatprep.subr.mxu0 0.0
    %752 = vmatpush2.msra.mxu0 0.0
    %753 = vmatprep.subr.mxu0 0.0
    %754 = vmatpush2.msra.mxu0 0.0
    %755 = vmatprep.subr.mxu0 0.0
    %756 = vmatpush2.msra.mxu0 0.0
    %757 = vmatprep.subr.mxu0 0.0
    %758 = vmatpush2.msra.mxu0 0.0
    %759 = vmatprep.subr.mxu0 0.0
    %760 = vmatpush2.msra.mxu0 0.0
    %761 = vmatprep.subr.mxu0 0.0
    %762 = vmatpush2.msra.mxu0 0.0
    %763 = vmatprep.subr.mxu0 0.0
    %764 = vmatpush2.msra.mxu0 0.0
    %765 = vmatprep.subr.mxu0 0.0
    %766 = vmatpush2.msra.mxu0 0.0
    %767 = vmatprep.mubr.f32.mxu0 0.0
    %768 = vmatmul.mubr.f32.gmra.mxu0 %v701
    %v769 = vpop.f32.mrf.mxu0
    %v770 = vadd.f32 %v46, %v769
    %v771 = vpop.f32.mrf.mxu0
    %772 = vdwg.mxu0
    %v773 = vsel %vm152, %v770, 0.0
    %774 = vadd.xlane.f32.xlu0 %v773
    %v775 = vpop.xlane.xlu0 %774
    %v776 = vmul.f32 %v775, %v156
    %v777 = vsub.f32 %v770, %v776
    %v778 = vmul.f32 %v777, %v777
    %v779 = vsel %vm152, %v778, 0.0
    %780 = vadd.xlane.f32.xlu0 %v779
    %v781 = vpop.xlane.xlu0 %780
    %v782 = vmul.f32 %v781, %v156
    %v783 = vadd.f32 %v782, 1e-05
    %v784 = vrsqrt.pop %v783
    %v785 = vmul.f32 %v777, %v784
    %v786 = vmul.f32 %v785, %v47
    %v787 = vadd.f32 %v786, %v48
    %v788 = vxor.u32 %v787, 2147483648
    %v789 = vmul.f32 %v788, 1.442695
    %v790 = vpow.pop %v789
    %v791 = vadd.f32 %v790, 1.0
    %v792 = vrcp.pop %v791
    %v793 = vmul.f32 1.0, %v792
    %v794 = vmul.f32 %v793, %v648
    %v796 = vrot.slane %v793, 1
    %v798 = vadd.f32 %v794, %v796
    %v799 = vrot.slane %v793, 7
    %v801 = vsub.f32 %v798, %v799
    %v802 = vsel %vm183, %v801, 0.0
    %803 = vadd.xlane.f32.xlu0 %v802
    %v804 = vpop.xlane.xlu0 %803
    %v805 = vmul.f32 %v804, %v156
    %v806 = vsub.f32 %v801, %v805
    %v807 = vmul.f32 %v806, %v806
    %v808 = vsel %vm183, %v807, 0.0
    %809 = vadd.xlane.f32.xlu0 %v808
    %v810 = vpop.xlane.xlu0 %809
    %v811 = vmul.f32 %v810, %v156
    %v812 = vadd.f32 %v811, 1e-05
    %v813 = vrsqrt.pop %v812
    %v814 = vmul.f32 %v806, %v813
    %v815 = vmul.f32 %v814, %v198
    %v816 = vadd.f32 %v815, %v202
    %v817 = vxor.u32 %v816, 2147483648
    %v818 = vmul.f32 %v817, 1.442695
    %v819 = vpow.pop %v818
    %v820 = vadd.f32 %v819, 1.0
    %v821 = vrcp.pop %v820
    %v822 = vmul.f32 1.0, %v821
    %v823 = vrot.slane %v793, 2
    %v825 = vsub.f32 %v822, %v823
    %s826 = sld [smem:[#allocation2 + $0x5]]
    %s827 = scalar_lea.vmem [#allocation5], %s826
    %v828 = vld [vmem:[%s827] sm:$0x1]
    %v830 = vrot.slane %v825, 1
    %831 = vrot.lane.b32.xlu0 %v830, 6
    %v832 = vpop.permute.xlu0 %831
    %v834 = vsel %vm55, %v828, %v832
    %836 = vrot.lane.b32.xlu0 %v834, 12
    %v837 = vpop.permute.xlu0 %836
    %839 = vrot.lane.b32.xlu0 %v834, 24
    %v840 = vpop.permute.xlu0 %839
    %842 = vrot.lane.b32.xlu0 %v834, 36
    %v843 = vpop.permute.xlu0 %842
    %v845 = vsel %vm67, %v834, %v837
    %v846 = vsel %vm69, %v845, %v840
    %v847 = vsel %vm71, %v846, %v843
    %v848 = vlaneseq
    %v849 = vshrl.u32 %v848, 7
    %v850 = vsub.s32 0, %v849
    %v851 = vrot.slane %v847, %v850
    %v852 = vmul.f32 %v44, %v851
    %v854 = vsel %vm78, %v852, 0
    %856 = vmatprep.subr.mxu0 0.0
    %857 = vmatpush1.msra.mxu0 0.0
    %858 = vmatprep.subr.mxu0 0.0
    %859 = vmatpush1.msra.mxu0 0.0
    %860 = vmatprep.subr.mxu0 0.0
    %861 = vmatpush1.msra.mxu0 0.0
    %862 = vmatprep.subr.mxu0 0.0
    %863 = vmatpush1.msra.mxu0 0.0
    %864 = vmatprep.subr.mxu0 0.0
    %865 = vmatpush1.msra.mxu0 0.0
    %866 = vmatprep.subr.mxu0 0.0
    %867 = vmatpush1.msra.mxu0 0.0
    %868 = vmatprep.subr.mxu0 0.0
    %869 = vmatpush1.msra.mxu0 0.0
    %870 = vmatprep.subr.mxu0 0.0
    %871 = vmatpush1.msra.mxu0 0.0
    %872 = vmatprep.subr.mxu0 0.0
    %873 = vmatpush1.msra.mxu0 0.0
    %874 = vmatprep.subr.mxu0 0.0
    %875 = vmatpush1.msra.mxu0 0.0
    %876 = vmatprep.subr.mxu0 0.0
    %877 = vmatpush1.msra.mxu0 %v43
    %878 = vmatprep.subr.mxu0 0.0
    %879 = vmatpush1.msra.mxu0 %v42
    %880 = vmatprep.subr.mxu0 0.0
    %881 = vmatpush1.msra.mxu0 %v41
    %882 = vmatprep.subr.mxu0 0.0
    %883 = vmatpush1.msra.mxu0 %v40
    %884 = vmatprep.subr.mxu0 0.0
    %885 = vmatpush1.msra.mxu0 %v39
    %886 = vmatprep.subr.mxu0 0.0
    %887 = vmatpush1.msra.mxu0 %v38
    %888 = vmatprep.subr.mxu0 0.0
    %889 = vmatpush2.msra.mxu0 0.0
    %890 = vmatprep.subr.mxu0 0.0
    %891 = vmatpush2.msra.mxu0 0.0
    %892 = vmatprep.subr.mxu0 0.0
    %893 = vmatpush2.msra.mxu0 0.0
    %894 = vmatprep.subr.mxu0 0.0
    %895 = vmatpush2.msra.mxu0 0.0
    %896 = vmatprep.subr.mxu0 0.0
    %897 = vmatpush2.msra.mxu0 0.0
    %898 = vmatprep.subr.mxu0 0.0
    %899 = vmatpush2.msra.mxu0 0.0
    %900 = vmatprep.subr.mxu0 0.0
    %901 = vmatpush2.msra.mxu0 0.0
    %902 = vmatprep.subr.mxu0 0.0
    %903 = vmatpush2.msra.mxu0 0.0
    %904 = vmatprep.subr.mxu0 0.0
    %905 = vmatpush2.msra.mxu0 0.0
    %906 = vmatprep.subr.mxu0 0.0
    %907 = vmatpush2.msra.mxu0 0.0
    %908 = vmatprep.subr.mxu0 0.0
    %909 = vmatpush2.msra.mxu0 0.0
    %910 = vmatprep.subr.mxu0 0.0
    %911 = vmatpush2.msra.mxu0 0.0
    %912 = vmatprep.subr.mxu0 0.0
    %913 = vmatpush2.msra.mxu0 0.0
    %914 = vmatprep.subr.mxu0 0.0
    %915 = vmatpush2.msra.mxu0 0.0
    %916 = vmatprep.subr.mxu0 0.0
    %917 = vmatpush2.msra.mxu0 0.0
    %918 = vmatprep.subr.mxu0 0.0
    %919 = vmatpush2.msra.mxu0 0.0
    %920 = vmatprep.mubr.f32.mxu0 0.0
    %921 = vmatmul.mubr.f32.gmra.mxu0 %v854
    %v922 = vpop.f32.mrf.mxu0
    %v923 = vadd.f32 %v46, %v922
    %v924 = vpop.f32.mrf.mxu0
    %925 = vdwg.mxu0
    %v926 = vsel %vm152, %v923, 0.0
    %927 = vadd.xlane.f32.xlu0 %v926
    %v928 = vpop.xlane.xlu0 %927
    %v929 = vmul.f32 %v928, %v156
    %v930 = vsub.f32 %v923, %v929
    %v931 = vmul.f32 %v930, %v930
    %v932 = vsel %vm152, %v931, 0.0
    %933 = vadd.xlane.f32.xlu0 %v932
    %v934 = vpop.xlane.xlu0 %933
    %v935 = vmul.f32 %v934, %v156
    %v936 = vadd.f32 %v935, 1e-05
    %v937 = vrsqrt.pop %v936
    %v938 = vmul.f32 %v930, %v937
    %v939 = vmul.f32 %v938, %v47
    %v940 = vadd.f32 %v939, %v48
    %v941 = vxor.u32 %v940, 2147483648
    %v942 = vmul.f32 %v941, 1.442695
    %v943 = vpow.pop %v942
    %v944 = vadd.f32 %v943, 1.0
    %v945 = vrcp.pop %v944
    %v946 = vmul.f32 1.0, %v945
    %v947 = vmul.f32 %v946, %v801
    %v949 = vrot.slane %v946, 1
    %v951 = vadd.f32 %v947, %v949
    %v952 = vrot.slane %v946, 7
    %v954 = vsub.f32 %v951, %v952
    %v955 = vsel %vm183, %v954, 0.0
    %956 = vadd.xlane.f32.xlu0 %v955
    %v957 = vpop.xlane.xlu0 %956
    %v958 = vmul.f32 %v957, %v156
    %v959 = vsub.f32 %v954, %v958
    %v960 = vmul.f32 %v959, %v959
    %v961 = vsel %vm183, %v960, 0.0
    %962 = vadd.xlane.f32.xlu0 %v961
    %v963 = vpop.xlane.xlu0 %962
    %v964 = vmul.f32 %v963, %v156
    %v965 = vadd.f32 %v964, 1e-05
    %v966 = vrsqrt.pop %v965
    %v967 = vmul.f32 %v959, %v966
    %v968 = vmul.f32 %v967, %v198
    %v969 = vadd.f32 %v968, %v202
    %v970 = vxor.u32 %v969, 2147483648
    %v971 = vmul.f32 %v970, 1.442695
    %v972 = vpow.pop %v971
    %v973 = vadd.f32 %v972, 1.0
    %v974 = vrcp.pop %v973
    %v975 = vmul.f32 1.0, %v974
    %v976 = vrot.slane %v946, 2
    %v978 = vsub.f32 %v975, %v976
    %s979 = sld [smem:[#allocation2 + $0x6]]
    %s980 = scalar_lea.vmem [#allocation5], %s979
    %v981 = vld [vmem:[%s980] sm:$0x1]
    %v983 = vrot.slane %v978, 1
    %984 = vrot.lane.b32.xlu0 %v983, 6
    %v985 = vpop.permute.xlu0 %984
    %v987 = vsel %vm55, %v981, %v985
    %989 = vrot.lane.b32.xlu0 %v987, 12
    %v990 = vpop.permute.xlu0 %989
    %992 = vrot.lane.b32.xlu0 %v987, 24
    %v993 = vpop.permute.xlu0 %992
    %995 = vrot.lane.b32.xlu0 %v987, 36
    %v996 = vpop.permute.xlu0 %995
    %v998 = vsel %vm67, %v987, %v990
    %v999 = vsel %vm69, %v998, %v993
    %v1000 = vsel %vm71, %v999, %v996
    %v1001 = vlaneseq
    %v1002 = vshrl.u32 %v1001, 7
    %v1003 = vsub.s32 0, %v1002
    %v1004 = vrot.slane %v1000, %v1003
    %v1005 = vmul.f32 %v44, %v1004
    %v1007 = vsel %vm78, %v1005, 0
    %1009 = vmatprep.subr.mxu0 0.0
    %1010 = vmatpush1.msra.mxu0 0.0
    %1011 = vmatprep.subr.mxu0 0.0
    %1012 = vmatpush1.msra.mxu0 0.0
    %1013 = vmatprep.subr.mxu0 0.0
    %1014 = vmatpush1.msra.mxu0 0.0
    %1015 = vmatprep.subr.mxu0 0.0
    %1016 = vmatpush1.msra.mxu0 0.0
    %1017 = vmatprep.subr.mxu0 0.0
    %1018 = vmatpush1.msra.mxu0 0.0
    %1019 = vmatprep.subr.mxu0 0.0
    %1020 = vmatpush1.msra.mxu0 0.0
    %1021 = vmatprep.subr.mxu0 0.0
    %1022 = vmatpush1.msra.mxu0 0.0
    %1023 = vmatprep.subr.mxu0 0.0
    %1024 = vmatpush1.msra.mxu0 0.0
    %1025 = vmatprep.subr.mxu0 0.0
    %1026 = vmatpush1.msra.mxu0 0.0
    %1027 = vmatprep.subr.mxu0 0.0
    %1028 = vmatpush1.msra.mxu0 0.0
    %1029 = vmatprep.subr.mxu0 0.0
    %1030 = vmatpush1.msra.mxu0 %v43
    %1031 = vmatprep.subr.mxu0 0.0
    %1032 = vmatpush1.msra.mxu0 %v42
    %1033 = vmatprep.subr.mxu0 0.0
    %1034 = vmatpush1.msra.mxu0 %v41
    %1035 = vmatprep.subr.mxu0 0.0
    %1036 = vmatpush1.msra.mxu0 %v40
    %1037 = vmatprep.subr.mxu0 0.0
    %1038 = vmatpush1.msra.mxu0 %v39
    %1039 = vmatprep.subr.mxu0 0.0
    %1040 = vmatpush1.msra.mxu0 %v38
    %1041 = vmatprep.subr.mxu0 0.0
    %1042 = vmatpush2.msra.mxu0 0.0
    %1043 = vmatprep.subr.mxu0 0.0
    %1044 = vmatpush2.msra.mxu0 0.0
    %1045 = vmatprep.subr.mxu0 0.0
    %1046 = vmatpush2.msra.mxu0 0.0
    %1047 = vmatprep.subr.mxu0 0.0
    %1048 = vmatpush2.msra.mxu0 0.0
    %1049 = vmatprep.subr.mxu0 0.0
    %1050 = vmatpush2.msra.mxu0 0.0
    %1051 = vmatprep.subr.mxu0 0.0
    %1052 = vmatpush2.msra.mxu0 0.0
    %1053 = vmatprep.subr.mxu0 0.0
    %1054 = vmatpush2.msra.mxu0 0.0
    %1055 = vmatprep.subr.mxu0 0.0
    %1056 = vmatpush2.msra.mxu0 0.0
    %1057 = vmatprep.subr.mxu0 0.0
    %1058 = vmatpush2.msra.mxu0 0.0
    %1059 = vmatprep.subr.mxu0 0.0
    %1060 = vmatpush2.msra.mxu0 0.0
    %1061 = vmatprep.subr.mxu0 0.0
    %1062 = vmatpush2.msra.mxu0 0.0
    %1063 = vmatprep.subr.mxu0 0.0
    %1064 = vmatpush2.msra.mxu0 0.0
    %1065 = vmatprep.subr.mxu0 0.0
    %1066 = vmatpush2.msra.mxu0 0.0
    %1067 = vmatprep.subr.mxu0 0.0
    %1068 = vmatpush2.msra.mxu0 0.0
    %1069 = vmatprep.subr.mxu0 0.0
    %1070 = vmatpush2.msra.mxu0 0.0
    %1071 = vmatprep.subr.mxu0 0.0
    %1072 = vmatpush2.msra.mxu0 0.0
    %1073 = vmatprep.mubr.f32.mxu0 0.0
    %1074 = vmatmul.mubr.f32.gmra.mxu0 %v1007
    %v1075 = vpop.f32.mrf.mxu0
    %v1076 = vadd.f32 %v46, %v1075
    %v1077 = vpop.f32.mrf.mxu0
    %1078 = vdwg.mxu0
    %v1079 = vsel %vm152, %v1076, 0.0
    %1080 = vadd.xlane.f32.xlu0 %v1079
    %v1081 = vpop.xlane.xlu0 %1080
    %v1082 = vmul.f32 %v1081, %v156
    %v1083 = vsub.f32 %v1076, %v1082
    %v1084 = vmul.f32 %v1083, %v1083
    %v1085 = vsel %vm152, %v1084, 0.0
    %1086 = vadd.xlane.f32.xlu0 %v1085
    %v1087 = vpop.xlane.xlu0 %1086
    %v1088 = vmul.f32 %v1087, %v156
    %v1089 = vadd.f32 %v1088, 1e-05
    %v1090 = vrsqrt.pop %v1089
    %v1091 = vmul.f32 %v1083, %v1090
    %v1092 = vmul.f32 %v1091, %v47
    %v1093 = vadd.f32 %v1092, %v48
    %v1094 = vxor.u32 %v1093, 2147483648
    %v1095 = vmul.f32 %v1094, 1.442695
    %v1096 = vpow.pop %v1095
    %v1097 = vadd.f32 %v1096, 1.0
    %v1098 = vrcp.pop %v1097
    %v1099 = vmul.f32 1.0, %v1098
    %v1100 = vmul.f32 %v1099, %v954
    %v1102 = vrot.slane %v1099, 1
    %v1104 = vadd.f32 %v1100, %v1102
    %v1105 = vrot.slane %v1099, 7
    %v1107 = vsub.f32 %v1104, %v1105
    %v1108 = vsel %vm183, %v1107, 0.0
    %1109 = vadd.xlane.f32.xlu0 %v1108
    %v1110 = vpop.xlane.xlu0 %1109
    %v1111 = vmul.f32 %v1110, %v156
    %v1112 = vsub.f32 %v1107, %v1111
    %v1113 = vmul.f32 %v1112, %v1112
    %v1114 = vsel %vm183, %v1113, 0.0
    %1115 = vadd.xlane.f32.xlu0 %v1114
    %v1116 = vpop.xlane.xlu0 %1115
    %v1117 = vmul.f32 %v1116, %v156
    %v1118 = vadd.f32 %v1117, 1e-05
    %v1119 = vrsqrt.pop %v1118
    %v1120 = vmul.f32 %v1112, %v1119
    %v1121 = vmul.f32 %v1120, %v198
    %v1122 = vadd.f32 %v1121, %v202
    %v1123 = vxor.u32 %v1122, 2147483648
    %v1124 = vmul.f32 %v1123, 1.442695
    %v1125 = vpow.pop %v1124
    %v1126 = vadd.f32 %v1125, 1.0
    %v1127 = vrcp.pop %v1126
    %v1128 = vmul.f32 1.0, %v1127
    %v1129 = vrot.slane %v1099, 2
    %v1131 = vsub.f32 %v1128, %v1129
    %s1132 = sld [smem:[#allocation2 + $0x7]]
    %s1133 = scalar_lea.vmem [#allocation5], %s1132
    %v1134 = vld [vmem:[%s1133] sm:$0x1]
    %v1136 = vrot.slane %v1131, 1
    %1137 = vrot.lane.b32.xlu0 %v1136, 6
    %v1138 = vpop.permute.xlu0 %1137
    %v1140 = vsel %vm55, %v1134, %v1138
    %1142 = vrot.lane.b32.xlu0 %v1140, 12
    %v1143 = vpop.permute.xlu0 %1142
    %1145 = vrot.lane.b32.xlu0 %v1140, 24
    %v1146 = vpop.permute.xlu0 %1145
    %1148 = vrot.lane.b32.xlu0 %v1140, 36
    %v1149 = vpop.permute.xlu0 %1148
    %v1151 = vsel %vm67, %v1140, %v1143
    %v1152 = vsel %vm69, %v1151, %v1146
    %v1153 = vsel %vm71, %v1152, %v1149
    %v1154 = vlaneseq
    %v1155 = vshrl.u32 %v1154, 7
    %v1156 = vsub.s32 0, %v1155
    %v1157 = vrot.slane %v1153, %v1156
    %v1158 = vmul.f32 %v44, %v1157
    %v1160 = vsel %vm78, %v1158, 0
    %1162 = vmatprep.subr.mxu0 0.0
    %1163 = vmatpush1.msra.mxu0 0.0
    %1164 = vmatprep.subr.mxu0 0.0
    %1165 = vmatpush1.msra.mxu0 0.0
    %1166 = vmatprep.subr.mxu0 0.0
    %1167 = vmatpush1.msra.mxu0 0.0
    %1168 = vmatprep.subr.mxu0 0.0
    %1169 = vmatpush1.msra.mxu0 0.0
    %1170 = vmatprep.subr.mxu0 0.0
    %1171 = vmatpush1.msra.mxu0 0.0
    %1172 = vmatprep.subr.mxu0 0.0
    %1173 = vmatpush1.msra.mxu0 0.0
    %1174 = vmatprep.subr.mxu0 0.0
    %1175 = vmatpush1.msra.mxu0 0.0
    %1176 = vmatprep.subr.mxu0 0.0
    %1177 = vmatpush1.msra.mxu0 0.0
    %1178 = vmatprep.subr.mxu0 0.0
    %1179 = vmatpush1.msra.mxu0 0.0
    %1180 = vmatprep.subr.mxu0 0.0
    %1181 = vmatpush1.msra.mxu0 0.0
    %1182 = vmatprep.subr.mxu0 0.0
    %1183 = vmatpush1.msra.mxu0 %v43
    %1184 = vmatprep.subr.mxu0 0.0
    %1185 = vmatpush1.msra.mxu0 %v42
    %1186 = vmatprep.subr.mxu0 0.0
    %1187 = vmatpush1.msra.mxu0 %v41
    %1188 = vmatprep.subr.mxu0 0.0
    %1189 = vmatpush1.msra.mxu0 %v40
    %1190 = vmatprep.subr.mxu0 0.0
    %1191 = vmatpush1.msra.mxu0 %v39
    %1192 = vmatprep.subr.mxu0 0.0
    %1193 = vmatpush1.msra.mxu0 %v38
    %1194 = vmatprep.subr.mxu0 0.0
    %1195 = vmatpush2.msra.mxu0 0.0
    %1196 = vmatprep.subr.mxu0 0.0
    %1197 = vmatpush2.msra.mxu0 0.0
    %1198 = vmatprep.subr.mxu0 0.0
    %1199 = vmatpush2.msra.mxu0 0.0
    %1200 = vmatprep.subr.mxu0 0.0
    %1201 = vmatpush2.msra.mxu0 0.0
    %1202 = vmatprep.subr.mxu0 0.0
    %1203 = vmatpush2.msra.mxu0 0.0
    %1204 = vmatprep.subr.mxu0 0.0
    %1205 = vmatpush2.msra.mxu0 0.0
    %1206 = vmatprep.subr.mxu0 0.0
    %1207 = vmatpush2.msra.mxu0 0.0
    %1208 = vmatprep.subr.mxu0 0.0
    %1209 = vmatpush2.msra.mxu0 0.0
    %1210 = vmatprep.subr.mxu0 0.0
    %1211 = vmatpush2.msra.mxu0 0.0
    %1212 = vmatprep.subr.mxu0 0.0
    %1213 = vmatpush2.msra.mxu0 0.0
    %1214 = vmatprep.subr.mxu0 0.0
    %1215 = vmatpush2.msra.mxu0 0.0
    %1216 = vmatprep.subr.mxu0 0.0
    %1217 = vmatpush2.msra.mxu0 0.0
    %1218 = vmatprep.subr.mxu0 0.0
    %1219 = vmatpush2.msra.mxu0 0.0
    %1220 = vmatprep.subr.mxu0 0.0
    %1221 = vmatpush2.msra.mxu0 0.0
    %1222 = vmatprep.subr.mxu0 0.0
    %1223 = vmatpush2.msra.mxu0 0.0
    %1224 = vmatprep.subr.mxu0 0.0
    %1225 = vmatpush2.msra.mxu0 0.0
    %1226 = vmatprep.mubr.f32.mxu0 0.0
    %1227 = vmatmul.mubr.f32.gmra.mxu0 %v1160
    %v1228 = vpop.f32.mrf.mxu0
    %v1229 = vadd.f32 %v46, %v1228
    %v1230 = vpop.f32.mrf.mxu0
    %1231 = vdwg.mxu0
    %v1232 = vsel %vm152, %v1229, 0.0
    %1233 = vadd.xlane.f32.xlu0 %v1232
    %v1234 = vpop.xlane.xlu0 %1233
    %v1235 = vmul.f32 %v1234, %v156
    %v1236 = vsub.f32 %v1229, %v1235
    %v1237 = vmul.f32 %v1236, %v1236
    %v1238 = vsel %vm152, %v1237, 0.0
    %1239 = vadd.xlane.f32.xlu0 %v1238
    %v1240 = vpop.xlane.xlu0 %1239
    %v1241 = vmul.f32 %v1240, %v156
    %v1242 = vadd.f32 %v1241, 1e-05
    %v1243 = vrsqrt.pop %v1242
    %v1244 = vmul.f32 %v1236, %v1243
    %v1245 = vmul.f32 %v1244, %v47
    %v1246 = vadd.f32 %v1245, %v48
    %v1247 = vxor.u32 %v1246, 2147483648
    %v1248 = vmul.f32 %v1247, 1.442695
    %v1249 = vpow.pop %v1248
    %v1250 = vadd.f32 %v1249, 1.0
    %v1251 = vrcp.pop %v1250
    %v1252 = vmul.f32 1.0, %v1251
    %v1253 = vmul.f32 %v1252, %v1107
    %v1255 = vrot.slane %v1252, 1
    %v1257 = vadd.f32 %v1253, %v1255
    %v1258 = vrot.slane %v1252, 7
    %v1260 = vsub.f32 %v1257, %v1258
    %v1261 = vsel %vm183, %v1260, 0.0
    %1262 = vadd.xlane.f32.xlu0 %v1261
    %v1263 = vpop.xlane.xlu0 %1262
    %v1264 = vmul.f32 %v1263, %v156
    %v1265 = vsub.f32 %v1260, %v1264
    %v1266 = vmul.f32 %v1265, %v1265
    %v1267 = vsel %vm183, %v1266, 0.0
    %1268 = vadd.xlane.f32.xlu0 %v1267
    %v1269 = vpop.xlane.xlu0 %1268
    %v1270 = vmul.f32 %v1269, %v156
    %v1271 = vadd.f32 %v1270, 1e-05
    %v1272 = vrsqrt.pop %v1271
    %v1273 = vmul.f32 %v1265, %v1272
    %v1274 = vmul.f32 %v1273, %v198
    %v1275 = vadd.f32 %v1274, %v202
    %v1276 = vxor.u32 %v1275, 2147483648
    %v1277 = vmul.f32 %v1276, 1.442695
    %v1278 = vpow.pop %v1277
    %v1279 = vadd.f32 %v1278, 1.0
    %v1280 = vrcp.pop %v1279
    %v1281 = vmul.f32 1.0, %v1280
    %v1282 = vrot.slane %v1252, 2
    %v1284 = vsub.f32 %v1281, %v1282
    %v1286 = vrot.slane %v519, 7
    %v1288 = vrot.slane %v672, 6
    %v1290 = vrot.slane %v825, 5
    %v1292 = vrot.slane %v978, 4
    %v1294 = vrot.slane %v1131, 3
    %v1297 = vrot.slane %v1284, 2
    %vm1299 = vcmask 1040384
    %v1300 = vsel %vm1299, %v218, %v366
    %vm1301 = vcmask 1041408
    %v1302 = vsel %vm1301, %v1300, %v1286
    %vm1303 = vcmask 1042432
    %v1304 = vsel %vm1303, %v1302, %v1288
    %vm1305 = vcmask 1043456
    %v1306 = vsel %vm1305, %v1304, %v1290
    %vm1307 = vcmask 1044480
    %v1308 = vsel %vm1307, %v1306, %v1292
    %vm1309 = vcmask 1045504
    %v1310 = vsel %vm1309, %v1308, %v1294
    %vm1311 = vcmask 1046528
    %v1312 = vsel %vm1311, %v1310, %v1297
    %v1313 = vlaneseq
    %v1314 = vshrl.u32 %v1313, 7
    %v1315 = vsub.s32 0, %v1314
    %v1316 = vrot.slane %v51, %v1315
    %v1318 = vsel %vm55, %v1312, 0
    %v1321 = vsel %vm1309, %v45, 0
    %1323 = vmatprep.subr.mxu0 0.0
    %1324 = vmatpush1.msra.mxu0 0.0
    %1325 = vmatprep.subr.mxu0 0.0
    %1326 = vmatpush1.msra.mxu0 0.0
    %1327 = vmatprep.subr.mxu0 0.0
    %1328 = vmatpush1.msra.mxu0 0.0
    %1329 = vmatprep.subr.mxu0 0.0
    %1330 = vmatpush1.msra.mxu0 0.0
    %1331 = vmatprep.subr.mxu0 0.0
    %1332 = vmatpush1.msra.mxu0 0.0
    %1333 = vmatprep.subr.mxu0 0.0
    %1334 = vmatpush1.msra.mxu0 0.0
    %1335 = vmatprep.subr.mxu0 0.0
    %1336 = vmatpush1.msra.mxu0 0.0
    %1337 = vmatprep.subr.mxu0 0.0
    %1338 = vmatpush1.msra.mxu0 0.0
    %1339 = vmatprep.subr.mxu0 0.0
    %1340 = vmatpush1.msra.mxu0 0.0
    %1341 = vmatprep.subr.mxu0 0.0
    %1342 = vmatpush1.msra.mxu0 0.0
    %1343 = vmatprep.subr.mxu0 0.0
    %1344 = vmatpush1.msra.mxu0 0.0
    %1345 = vmatprep.subr.mxu0 0.0
    %1346 = vmatpush1.msra.mxu0 0.0
    %1347 = vmatprep.subr.mxu0 0.0
    %1348 = vmatpush1.msra.mxu0 0.0
    %1349 = vmatprep.subr.mxu0 0.0
    %1350 = vmatpush1.msra.mxu0 0.0
    %1351 = vmatprep.subr.mxu0 0.0
    %1352 = vmatpush1.msra.mxu0 0.0
    %1353 = vmatprep.subr.mxu0 0.0
    %1354 = vmatpush1.msra.mxu0 %v1321
    %1355 = vmatprep.subr.mxu0 0.0
    %1356 = vmatpush2.msra.mxu0 0.0
    %1357 = vmatprep.subr.mxu0 0.0
    %1358 = vmatpush2.msra.mxu0 0.0
    %1359 = vmatprep.subr.mxu0 0.0
    %1360 = vmatpush2.msra.mxu0 0.0
    %1361 = vmatprep.subr.mxu0 0.0
    %1362 = vmatpush2.msra.mxu0 0.0
    %1363 = vmatprep.subr.mxu0 0.0
    %1364 = vmatpush2.msra.mxu0 0.0
    %1365 = vmatprep.subr.mxu0 0.0
    %1366 = vmatpush2.msra.mxu0 0.0
    %1367 = vmatprep.subr.mxu0 0.0
    %1368 = vmatpush2.msra.mxu0 0.0
    %1369 = vmatprep.subr.mxu0 0.0
    %1370 = vmatpush2.msra.mxu0 0.0
    %1371 = vmatprep.subr.mxu0 0.0
    %1372 = vmatpush2.msra.mxu0 0.0
    %1373 = vmatprep.subr.mxu0 0.0
    %1374 = vmatpush2.msra.mxu0 0.0
    %1375 = vmatprep.subr.mxu0 0.0
    %1376 = vmatpush2.msra.mxu0 0.0
    %1377 = vmatprep.subr.mxu0 0.0
    %1378 = vmatpush2.msra.mxu0 0.0
    %1379 = vmatprep.subr.mxu0 0.0
    %1380 = vmatpush2.msra.mxu0 0.0
    %1381 = vmatprep.subr.mxu0 0.0
    %1382 = vmatpush2.msra.mxu0 0.0
    %1383 = vmatprep.subr.mxu0 0.0
    %1384 = vmatpush2.msra.mxu0 0.0
    %1385 = vmatprep.subr.mxu0 0.0
    %1386 = vmatpush2.msra.mxu0 0.0
    %1387 = vmatprep.mubr.f32.mxu0 0.0
    %1388 = vmatmul.mubr.f32.gmra.mxu0 %v1318
    %v1389 = vpop.f32.mrf.mxu0
    %v1390 = vadd.f32 %v1316, %v1389
    %v1391 = vpop.f32.mrf.mxu0
    %1392 = vdwg.mxu0
    %vm1393 = vcmask 15360
    %v1394 = vsel %vm1393, %v1390, -inf
    %1395 = vmax.xlane.f32.xlu0 %v1394
    %v1396 = vpop.xlane.xlu0 %1395
    %v1397 = vsub.f32 %v1390, %v1396
    %v1398 = vmul.f32 %v1397, 1.442695
    %v1399 = vpow.pop %v1398
    %v1400 = vsel %vm1393, %v1399, 0.0
    %1401 = vadd.xlane.f32.xlu0 %v1400
    %v1402 = vpop.xlane.xlu0 %1401
    %v1403 = vlog2.pop %v1402
    %v1404 = vmul.f32 %v1403, 0.6931472
    %v1405 = vsub.f32 %v1397, %v1404
    %1406 = vst [vmem:[%s2] sm:$0xff] 0.0
    %1407 = vst [vmem:[%s2 + $0x8] sm:$0xff] 0.0
    %1408 = vst.msk [vmem:[%s2] sm:$0xff] %vm1393, %v1405
    %1409 = vst.msk [vmem:[%s2 + $0x7] sm:$0x2] %vm183, %v1284
    %1410 = vst.msk [vmem:[%s2 + $0x8] sm:$0x2] %vm183, %v1260
    // Predicated region
    $region18: #{lstm_tagger_forward.1} parent=1 // pred_check
      _
    $region19: #{lstm_tagger_forward.1} parent=1 // pred_check_branch
      %1412 = sbr.rel (0) target = $region21
    $region20: #{lstm_tagger_forward.1} parent=1 // pred_region
      _
    $region21: #{lstm_tagger_forward.1} parent=1 // pred_fallthru
      _
    // Predicated region
    $region22: #{lstm_tagger_forward.1} parent=1 // pred_check
      _
    $region23: #{lstm_tagger_forward.1} parent=1 // pred_check_branch
      %1414 = sbr.rel (0) target = $region25
    $region24: #{lstm_tagger_forward.1} parent=1 // pred_region
      _
    $region25: #{lstm_tagger_forward.1} parent=1 // pred_fallthru
      _
    %1415 = vsyncpa [#allocation3], 1
    %1416 = vsyncpa [#allocation4], 1

</llo_original>
